<compile_context>
chip_gen: v7x
topology: tpu7x:2x2x1
jax: 0.10.0
libtpu: 0.0.40
codegen_flags: <defaults>
</compile_context>

<pallas_src>
import functools

import jax
import jax.numpy as jnp
from jax.experimental import pallas as pl
from jax.experimental.pallas import tpu as pltpu

LANE = 128            # TPU lane width; small feature dims are padded to this
_F32 = jnp.float32
_BF16 = jnp.bfloat16


def _ceil_to(v, m):
    return ((v + m - 1) // m) * m


def _pad2(a, rows, cols, dtype):
    a = jnp.asarray(a, _F32)
    out = jnp.zeros((rows, cols), _F32)
    out = out.at[: a.shape[0], : a.shape[1]].set(a)
    return out.astype(dtype)


def _fcg_kernel(
    # per-row-tile streamed inputs -------------------------------------------
    a_ref,          # (TILE_N, N_pad) bf16  raw adjacency rows (zero padded)
    dinv_rt_ref,    # (1, 1, TILE_N)  f32   d^-1/2 of the tile rows (row vector)
    dinv_ct_ref,    # (TILE_N, 1)     f32   d^-1/2 of the tile rows (col vector)
    # VMEM-resident inputs (constant index_map) -------------------------------
    dinv_row_ref,   # (1, N_pad)      f32   d^-1/2 of every node
    xs_ref,         # (N_pad, 128)    bf16  D^-1/2 X
    selfloop_ref,   # (N_pad, 128)    f32   D^-1 X  (self-loop term of A_norm X)
    w1_ref, b1_ref,                     # GCN layer 1
    w2_ref, b2_ref,                     # GCN layer 2
    x_ref,                              # (1, FEATP) f32
    wfc1_ref, bfc1_ref,
    wfc2x_ref, wfc2g_ref, bfc2_ref,
    wfc3_ref, bfc3_ref,
    # output -------------------------------------------------------------------
    out_ref,        # (1, OUTP) f32
    # scratch (persists across the row-tile grid) -------------------------------
    ax_acc,         # (N_pad, 128) f32   rows of D^-1/2 A D^-1/2 X
    colsum_acc,     # (1, N_pad)   f32   column sums of D^-1/2 A
    *,
    tile_n,
    inv_num_nodes,
):
    t = pl.program_id(0)

    @pl.when(t == 0)
    def _init():
        colsum_acc[...] = jnp.zeros_like(colsum_acc)

    a_tile = a_ref[...]                               # (TILE_N, N_pad) bf16
    dr_col = dinv_ct_ref[...]                         # (TILE_N, 1)     f32

    # --- GCN layer-1 SpMM for this row tile (MXU, bf16 in / f32 accumulate) ---
    ax_rows = dr_col * jnp.dot(a_tile, xs_ref[...],
                               preferred_element_type=_F32)
    row0 = pl.multiple_of(t * tile_n, tile_n)
    ax_acc[pl.ds(row0, tile_n), :] = ax_rows

    # --- partial column sums of D^-1/2 A (replaces the 2nd pass over A) -------
    dr_row = dinv_rt_ref[0].astype(_BF16)             # (1, TILE_N)
    colsum_acc[...] += jnp.dot(dr_row, a_tile, preferred_element_type=_F32)

    # --- epilogue: tiny GCN/FC matmuls, once, after the last A tile -----------
    @pl.when(t == pl.num_programs(0) - 1)
    def _epilogue():
        # GCN layer 1: H1 = relu(A_norm X W1 + b1)
        ax_full = ax_acc[...] + selfloop_ref[...]     # = A_norm @ X
        h1 = jnp.maximum(
            jnp.dot(ax_full.astype(_BF16), w1_ref[...],
                    preferred_element_type=_F32) + b1_ref[...], 0.0)

        # GCN layer 2 + mean pooling, via column sums of A_norm:
        #   mean_i(A_norm H1 W2 + b2)_i = (1/N) colsum(A_norm) @ H1 @ W2 + b2
        d_all = dinv_row_ref[...]
        colsum = colsum_acc[...] * d_all + d_all * d_all
        graph_pre = jnp.dot(colsum.astype(_BF16), h1.astype(_BF16),
                            preferred_element_type=_F32) * inv_num_nodes
        graph_state = jnp.dot(graph_pre.astype(_BF16), w2_ref[...],
                              preferred_element_type=_F32) + b2_ref[...]

        # fc1 -> ReLU
        h = jnp.maximum(
            jnp.dot(x_ref[...].astype(_BF16), wfc1_ref[...],
                    preferred_element_type=_F32) + bfc1_ref[...], 0.0)

        # fc2(cat(h, graph_state)) -> ReLU   (split-weight concat)
        z = jnp.maximum(
            jnp.dot(h.astype(_BF16), wfc2x_ref[...],
                    preferred_element_type=_F32)
            + jnp.dot(graph_state.astype(_BF16), wfc2g_ref[...],
                      preferred_element_type=_F32)
            + bfc2_ref[...], 0.0)

        # fc3 (lane-dense (1, OUTP) output block; wrapper slices to outChs)
        out_ref[...] = (jnp.dot(z.astype(_BF16), wfc3_ref[...],
                                preferred_element_type=_F32) + bfc3_ref[...])


def fully_connected_graph_forward(x, node_feats, adj, params):
    """x: (numFeats,), node_feats: (N, 6), adj: (N, N) dense 0/1 (no self loops)."""
    num_feats = x.shape[0]
    out_chs = params["fc3_b"].shape[0]
    fc1_out = params["fc1_b"].shape[0]            # = 32 - 4 = 28
    n = adj.shape[0]

    # ---- O(N) glue: degrees of (A + I); NO (N, N) normalized matrix ----------
    deg = jnp.sum(adj, axis=1) + 1.0
    dinv = 1.0 / jnp.sqrt(deg)                    # (N,)
    xs = dinv[:, None] * node_feats               # D^-1/2 X
    selfloop = dinv[:, None] * xs                 # D^-1 X

    # ---- padding / row-tile selection -----------------------------------------
    n_pad = _ceil_to(n, LANE)
    tile_n = LANE
    # Largest row tile whose double-buffered bf16 A blocks stay <= 4 MiB.
    # Fits the default scoped-VMEM limit on v5e/v6e/v7x with headroom
    # (conservative for v7x's 64 MiB physical VMEM).
    for cand in (512, 256, 128):
        if cand <= n_pad and n_pad % cand == 0 and 2 * cand * n_pad * 2 <= 4 * 2**20:
            tile_n = cand
            break
    n_tiles = n_pad // tile_n
    feat_p = _ceil_to(num_feats, LANE)
    out_p = _ceil_to(out_chs, LANE)

    # ---- padded operands (ideally the caller already stores A as padded bf16) -
    a_pad = _pad2(adj, n_pad, n_pad, _BF16)               # streamed (bf16)
    dinv_pad = jnp.zeros((n_pad,), _F32).at[:n].set(dinv)
    dinv_rt = dinv_pad.reshape(n_tiles, 1, tile_n)
    dinv_ct = dinv_pad.reshape(n_pad, 1)
    dinv_row = dinv_pad.reshape(1, n_pad)
    xs_pad = _pad2(xs, n_pad, LANE, _BF16)
    selfloop_pad = _pad2(selfloop, n_pad, LANE, _F32)

    w1_pad = _pad2(params["gcn_w1"], LANE, LANE, _BF16)
    b1_pad = _pad2(params["gcn_b1"][None, :], 1, LANE, _F32)
    w2_pad = _pad2(params["gcn_w2"], LANE, LANE, _BF16)
    b2_pad = _pad2(params["gcn_b2"][None, :], 1, LANE, _F32)

    x_row = _pad2(x[None, :], 1, feat_p, _F32)
    wfc1_pad = _pad2(params["fc1_w"], feat_p, LANE, _BF16)
    bfc1_pad = _pad2(params["fc1_b"][None, :], 1, LANE, _F32)
    wfc2x_pad = _pad2(params["fc2_w"][:fc1_out, :], LANE, LANE, _BF16)
    wfc2g_pad = _pad2(params["fc2_w"][fc1_out:, :], LANE, LANE, _BF16)
    bfc2_pad = _pad2(params["fc2_b"][None, :], 1, LANE, _F32)
    wfc3_pad = _pad2(params["fc3_w"], LANE, out_p, _BF16)
    bfc3_pad = _pad2(params["fc3_b"][None, :], 1, out_p, _F32)

    row = lambda i: (i, 0)
    row3 = lambda i: (i, 0, 0)
    full2 = lambda i: (0, 0)

    in_specs = [
        pl.BlockSpec((tile_n, n_pad), row),        # A rows (streamed)
        pl.BlockSpec((1, 1, tile_n), row3),        # d^-1/2 tile rows (row vec)
        pl.BlockSpec((tile_n, 1), row),            # d^-1/2 tile rows (col vec)
        pl.BlockSpec((1, n_pad), full2),           # d^-1/2 (all nodes)
        pl.BlockSpec((n_pad, LANE), full2),        # D^-1/2 X
        pl.BlockSpec((n_pad, LANE), full2),        # D^-1 X
        pl.BlockSpec((LANE, LANE), full2),         # GCN W1
        pl.BlockSpec((1, LANE), full2),            # GCN b1
        pl.BlockSpec((LANE, LANE), full2),         # GCN W2
        pl.BlockSpec((1, LANE), full2),            # GCN b2
        pl.BlockSpec((1, feat_p), full2),          # x
        pl.BlockSpec((feat_p, LANE), full2),       # fc1 W
        pl.BlockSpec((1, LANE), full2),            # fc1 b
        pl.BlockSpec((LANE, LANE), full2),         # fc2 W (x slice, rows :28)
        pl.BlockSpec((LANE, LANE), full2),         # fc2 W (graph slice, rows 28:)
        pl.BlockSpec((1, LANE), full2),            # fc2 b
        pl.BlockSpec((LANE, out_p), full2),        # fc3 W
        pl.BlockSpec((1, out_p), full2),           # fc3 b
    ]

    grid_spec = pltpu.PrefetchScalarGridSpec(
        num_scalar_prefetch=0,
        grid=(n_tiles,),
        in_specs=in_specs,
        out_specs=pl.BlockSpec((1, out_p), full2),
        scratch_shapes=[
            pltpu.VMEM((n_pad, LANE), _F32),       # rows of D^-1/2 A D^-1/2 X
            pltpu.VMEM((1, n_pad), _F32),          # column sums of D^-1/2 A
        ],
    )

    kernel = functools.partial(_fcg_kernel, tile_n=tile_n,
                               inv_num_nodes=1.0 / n)

    out_padded = pl.pallas_call(
        kernel,
        grid_spec=grid_spec,
        out_shape=jax.ShapeDtypeStruct((1, out_p), _F32),
        compiler_params=pltpu.CompilerParams(
            # The single streamed row-tile axis carries the colsum accumulation
            # and the last-step epilogue -> must stay "arbitrary".
            # TODO(synk): a two-stage reduction to mark this axis "parallel"
            # for v7x megacore is not implemented.
            dimension_semantics=("arbitrary",),
            vmem_limit_bytes=32 * 1024 * 1024,
        ),
    )(a_pad, dinv_rt, dinv_ct, dinv_row, xs_pad, selfloop_pad,
      w1_pad, b1_pad, w2_pad, b2_pad,
      x_row, wfc1_pad, bfc1_pad, wfc2x_pad, wfc2g_pad, bfc2_pad,
      wfc3_pad, bfc3_pad)

    return out_padded[0, :out_chs]


# ------------------------------- reference ----------------------------------
def reference_forward(x, node_feats, adj, params):
    n = adj.shape[0]
    a_hat = adj + jnp.eye(n, dtype=adj.dtype)
    deg = a_hat.sum(axis=1)
    dinv = 1.0 / jnp.sqrt(deg)
    a_norm = dinv[:, None] * a_hat * dinv[None, :]
    h1 = jax.nn.relu(a_norm @ node_feats @ params["gcn_w1"] + params["gcn_b1"])
    h2 = a_norm @ h1 @ params["gcn_w2"] + params["gcn_b2"]
    graph_state = h2.mean(axis=0)
    h = jax.nn.relu(x @ params["fc1_w"] + params["fc1_b"])
    z = jax.nn.relu(jnp.concatenate([h, graph_state], axis=0) @ params["fc2_w"]
                    + params["fc2_b"])
    return z @ params["fc3_w"] + params["fc3_b"]


def make_params(key, num_feats, out_chs):
    def linear(k, fan_in, fan_out):
        bound = 1.0 / (fan_in ** 0.5)
        kw, kb = jax.random.split(k)
        w = jax.random.uniform(kw, (fan_in, fan_out), _F32, -bound, bound)
        b = jax.random.uniform(kb, (fan_out,), _F32, -bound, bound)
        return w, b

    ks = jax.random.split(key, 5)
    fc1_w, fc1_b = linear(ks[0], num_feats, 32 - 4)
    fc2_w, fc2_b = linear(ks[1], 32, 32)
    fc3_w, fc3_b = linear(ks[2], 32, out_chs)
    g1_w, g1_b = linear(ks[3], 6, 12)
    g2_w, g2_b = linear(ks[4], 12, 4)
    return dict(fc1_w=fc1_w, fc1_b=fc1_b, fc2_w=fc2_w, fc2_b=fc2_b,
                fc3_w=fc3_w, fc3_b=fc3_b,
                gcn_w1=g1_w, gcn_b1=g1_b, gcn_w2=g2_w, gcn_b2=g2_b)


if __name__ == "__main__":
    key = jax.random.PRNGKey(0)
    k_param, k_x, k_feat, k_adj = jax.random.split(key, 4)

    num_feats, out_chs = 16, 10
    n_nodes = 300                                   # -> 3 streamed A row tiles

    params = make_params(k_param, num_feats, out_chs)
    x = jax.random.normal(k_x, (num_feats,), _F32)
    node_feats = jax.random.normal(k_feat, (n_nodes, 6), _F32)
    logits = jax.random.uniform(k_adj, (n_nodes, n_nodes), _F32)
    adj = ((logits + logits.T) > 1.2).astype(_F32)
    adj = adj * (1.0 - jnp.eye(n_nodes, dtype=_F32))    # raw A: no self loops

    fwd = jax.jit(fully_connected_graph_forward)
    out = jax.block_until_ready(fwd(x, node_feats, adj, params))

    ref = reference_forward(x, node_feats, adj, params)
    assert out.shape == (out_chs,), out.shape
    max_err = float(jnp.max(jnp.abs(out - ref)))
    # bf16 adjacency / activations inside the kernel -> loose tolerance vs f32
    if not bool(jnp.allclose(out, ref, rtol=5e-2, atol=5e-2)):
        raise SystemExit(f"mismatch vs reference (max abs err = {max_err})")
    print("KERNEL_OK")
</pallas_src>

<mosaic_0001>
module attributes {stable_mosaic.version = 11 : i64} {
  func.func @_fcg_kernel(%arg0: i32, %arg1: memref<128x384xbf16, #tpu.memory_space<vmem>>, %arg2: memref<1x1x128xf32, #tpu.memory_space<vmem>>, %arg3: memref<128x1xf32, #tpu.memory_space<vmem>>, %arg4: memref<1x384xf32, #tpu.memory_space<vmem>>, %arg5: memref<384x128xbf16, #tpu.memory_space<vmem>>, %arg6: memref<384x128xf32, #tpu.memory_space<vmem>>, %arg7: memref<128x128xbf16, #tpu.memory_space<vmem>>, %arg8: memref<1x128xf32, #tpu.memory_space<vmem>>, %arg9: memref<128x128xbf16, #tpu.memory_space<vmem>>, %arg10: memref<1x128xf32, #tpu.memory_space<vmem>>, %arg11: memref<1x128xf32, #tpu.memory_space<vmem>>, %arg12: memref<128x128xbf16, #tpu.memory_space<vmem>>, %arg13: memref<1x128xf32, #tpu.memory_space<vmem>>, %arg14: memref<128x128xbf16, #tpu.memory_space<vmem>>, %arg15: memref<128x128xbf16, #tpu.memory_space<vmem>>, %arg16: memref<1x128xf32, #tpu.memory_space<vmem>>, %arg17: memref<128x128xbf16, #tpu.memory_space<vmem>>, %arg18: memref<1x128xf32, #tpu.memory_space<vmem>>, %arg19: memref<1x128xf32, #tpu.memory_space<vmem>>, %arg20: memref<384x128xf32, #tpu.memory_space<vmem>>, %arg21: memref<1x384xf32, #tpu.memory_space<vmem>>) attributes {dimension_semantics = [#tpu.dimension_semantics<arbitrary>], iteration_bounds = array<i64: 3>, scalar_prefetch = 0 : i64, scratch_operands = 2 : i64, tpu.core_type = #tpu.core_type<tc>, window_params = [{transform_indices = @transform_0, window_bounds = array<i64: 128, 384>}, {transform_indices = @transform_1, window_bounds = array<i64: 1, 1, 128>}, {transform_indices = @transform_2, window_bounds = array<i64: 128, 1>}, {pipeline_mode = #tpu.pipeline_mode<synchronous>, transform_indices = @transform_3, window_bounds = array<i64: 1, 384>}, {pipeline_mode = #tpu.pipeline_mode<synchronous>, transform_indices = @transform_4, window_bounds = array<i64: 384, 128>}, {pipeline_mode = #tpu.pipeline_mode<synchronous>, transform_indices = @transform_5, window_bounds = array<i64: 384, 128>}, {pipeline_mode = #tpu.pipeline_mode<synchronous>, transform_indices = @transform_6, window_bounds = array<i64: 128, 128>}, {pipeline_mode = #tpu.pipeline_mode<synchronous>, transform_indices = @transform_7, window_bounds = array<i64: 1, 128>}, {pipeline_mode = #tpu.pipeline_mode<synchronous>, transform_indices = @transform_8, window_bounds = array<i64: 128, 128>}, {pipeline_mode = #tpu.pipeline_mode<synchronous>, transform_indices = @transform_9, window_bounds = array<i64: 1, 128>}, {pipeline_mode = #tpu.pipeline_mode<synchronous>, transform_indices = @transform_10, window_bounds = array<i64: 1, 128>}, {pipeline_mode = #tpu.pipeline_mode<synchronous>, transform_indices = @transform_11, window_bounds = array<i64: 128, 128>}, {pipeline_mode = #tpu.pipeline_mode<synchronous>, transform_indices = @transform_12, window_bounds = array<i64: 1, 128>}, {pipeline_mode = #tpu.pipeline_mode<synchronous>, transform_indices = @transform_13, window_bounds = array<i64: 128, 128>}, {pipeline_mode = #tpu.pipeline_mode<synchronous>, transform_indices = @transform_14, window_bounds = array<i64: 128, 128>}, {pipeline_mode = #tpu.pipeline_mode<synchronous>, transform_indices = @transform_15, window_bounds = array<i64: 1, 128>}, {pipeline_mode = #tpu.pipeline_mode<synchronous>, transform_indices = @transform_16, window_bounds = array<i64: 128, 128>}, {pipeline_mode = #tpu.pipeline_mode<synchronous>, transform_indices = @transform_17, window_bounds = array<i64: 1, 128>}, {pipeline_mode = #tpu.pipeline_mode<synchronous>, transform_indices = @transform_18, window_bounds = array<i64: 1, 128>}]} {
    %c0_i32 = arith.constant 0 : i32
    %0 = arith.cmpi eq, %arg0, %c0_i32 : i32
    %1 = arith.extui %0 : i1 to i32
    %c0_i32_0 = arith.constant 0 : i32
    %2 = arith.cmpi ne, %1, %c0_i32_0 : i32
    scf.if %2 {
      %cst_16 = arith.constant 0.000000e+00 : f32
      %23 = vector.broadcast %cst_16 : f32 to vector<1x384xf32>
      %c0_17 = arith.constant 0 : index
      %c0_18 = arith.constant 0 : index
      %24 = vector.load %arg21[%c0_17, %c0_18] : memref<1x384xf32, #tpu.memory_space<vmem>>, vector<1x384xf32>
      tpu.vector_store %arg21[%c0_17, %c0_18], %23 {strides = array<i32>} : memref<1x384xf32, #tpu.memory_space<vmem>>, vector<1x384xf32>,
    } else {
    }
    %c0 = arith.constant 0 : index
    %c0_1 = arith.constant 0 : index
    %3 = vector.load %arg1[%c0, %c0_1] : memref<128x384xbf16, #tpu.memory_space<vmem>>, vector<128x384xbf16>
    %c0_2 = arith.constant 0 : index
    %c0_3 = arith.constant 0 : index
    %4 = vector.load %arg3[%c0_2, %c0_3] : memref<128x1xf32, #tpu.memory_space<vmem>>, vector<128x1xf32>
    %c0_4 = arith.constant 0 : index
    %c0_5 = arith.constant 0 : index
    %5 = vector.load %arg5[%c0_4, %c0_5] : memref<384x128xbf16, #tpu.memory_space<vmem>>, vector<384x128xbf16>
    %cst = arith.constant dense<0.000000e+00> : vector<128x128xf32>
    %6 = tpu.matmul %3, %5, %cst {dimension_numbers = #tpu.dot_dimension_numbers<[1], [0], [0], [1], [0, 0, 1, 1], [], []>} : vector<128x384xbf16>, vector<384x128xbf16>, vector<128x128xf32> -> vector<128x128xf32>
    %7 = vector.broadcast %4 : vector<128x1xf32> to vector<128x128xf32>
    %8 = arith.mulf %7, %6 : vector<128x128xf32>
    %c128_i32 = arith.constant 128 : i32
    %9 = arith.muli %arg0, %c128_i32 : i32
    %10 = tpu.assume_multiple %9, 128 : i32
    %11 = arith.index_cast %10 : i32 to index
    %c0_6 = arith.constant 0 : index
    %12 = vector.load %arg20[%11, %c0_6] : memref<384x128xf32, #tpu.memory_space<vmem>>, vector<128x128xf32>
    tpu.vector_store %arg20[%11, %c0_6], %8 {strides = array<i32>} : memref<384x128xf32, #tpu.memory_space<vmem>>, vector<128x128xf32>,
    %c0_7 = arith.constant 0 : index
    %c0_8 = arith.constant 0 : index
    %c0_9 = arith.constant 0 : index
    %13 = vector.load %arg2[%c0_7, %c0_8, %c0_9] : memref<1x1x128xf32, #tpu.memory_space<vmem>>, vector<1x1x128xf32>
    %14 = vector.shape_cast %13 : vector<1x1x128xf32> to vector<1x128xf32>
    %15 = arith.truncf %14 : vector<1x128xf32> to vector<1x128xbf16>
    %c0_10 = arith.constant 0 : index
    %c0_11 = arith.constant 0 : index
    %16 = vector.load %arg21[%c0_10, %c0_11] : memref<1x384xf32, #tpu.memory_space<vmem>>, vector<1x384xf32>
    %cst_12 = arith.constant dense<0.000000e+00> : vector<1x384xf32>
    %17 = tpu.matmul %15, %3, %cst_12 {dimension_numbers = #tpu.dot_dimension_numbers<[1], [0], [0], [1], [0, 0, 1, 1], [], []>} : vector<1x128xbf16>, vector<128x384xbf16>, vector<1x384xf32> -> vector<1x384xf32>
    %18 = arith.addf %16, %17 : vector<1x384xf32>
    %c0_13 = arith.constant 0 : index
    %c0_14 = arith.constant 0 : index
    %19 = vector.load %arg21[%c0_13, %c0_14] : memref<1x384xf32, #tpu.memory_space<vmem>>, vector<1x384xf32>
    tpu.vector_store %arg21[%c0_13, %c0_14], %18 {strides = array<i32>} : memref<1x384xf32, #tpu.memory_space<vmem>>, vector<1x384xf32>,
    %c2_i32 = arith.constant 2 : i32
    %20 = arith.cmpi eq, %arg0, %c2_i32 : i32
    %21 = arith.extui %20 : i1 to i32
    %c0_i32_15 = arith.constant 0 : i32
    %22 = arith.cmpi ne, %21, %c0_i32_15 : i32
    scf.if %22 {
      %c0_16 = arith.constant 0 : index
      %c0_17 = arith.constant 0 : index
      %23 = vector.load %arg20[%c0_16, %c0_17] : memref<384x128xf32, #tpu.memory_space<vmem>>, vector<384x128xf32>
      %c0_18 = arith.constant 0 : index
      %c0_19 = arith.constant 0 : index
      %24 = vector.load %arg6[%c0_18, %c0_19] : memref<384x128xf32, #tpu.memory_space<vmem>>, vector<384x128xf32>
      %25 = arith.addf %23, %24 : vector<384x128xf32>
      %26 = arith.truncf %25 : vector<384x128xf32> to vector<384x128xbf16>
      %c0_20 = arith.constant 0 : index
      %c0_21 = arith.constant 0 : index
      %27 = vector.load %arg7[%c0_20, %c0_21] : memref<128x128xbf16, #tpu.memory_space<vmem>>, vector<128x128xbf16>
      %cst_22 = arith.constant dense<0.000000e+00> : vector<384x128xf32>
      %28 = tpu.matmul %26, %27, %cst_22 {dimension_numbers = #tpu.dot_dimension_numbers<[1], [0], [0], [1], [0, 0, 1, 1], [], []>} : vector<384x128xbf16>, vector<128x128xbf16>, vector<384x128xf32> -> vector<384x128xf32>
      %c0_23 = arith.constant 0 : index
      %c0_24 = arith.constant 0 : index
      %29 = vector.load %arg8[%c0_23, %c0_24] : memref<1x128xf32, #tpu.memory_space<vmem>>, vector<1x128xf32>
      %30 = vector.broadcast %29 : vector<1x128xf32> to vector<384x128xf32>
      %31 = arith.addf %28, %30 : vector<384x128xf32>
      %cst_25 = arith.constant 0.000000e+00 : f32
      %32 = vector.broadcast %cst_25 : f32 to vector<384x128xf32>
      %33 = arith.maximumf %31, %32 : vector<384x128xf32>
      %c0_26 = arith.constant 0 : index
      %c0_27 = arith.constant 0 : index
      %34 = vector.load %arg4[%c0_26, %c0_27] : memref<1x384xf32, #tpu.memory_space<vmem>>, vector<1x384xf32>
      %c0_28 = arith.constant 0 : index
      %c0_29 = arith.constant 0 : index
      %35 = vector.load %arg21[%c0_28, %c0_29] : memref<1x384xf32, #tpu.memory_space<vmem>>, vector<1x384xf32>
      %36 = arith.mulf %35, %34 : vector<1x384xf32>
      %37 = arith.mulf %34, %34 : vector<1x384xf32>
      %38 = arith.addf %36, %37 : vector<1x384xf32>
      %39 = arith.truncf %38 : vector<1x384xf32> to vector<1x384xbf16>
      %40 = arith.truncf %33 : vector<384x128xf32> to vector<384x128xbf16>
      %cst_30 = arith.constant dense<0.000000e+00> : vector<1x128xf32>
      %41 = tpu.matmul %39, %40, %cst_30 {dimension_numbers = #tpu.dot_dimension_numbers<[1], [0], [0], [1], [0, 0, 1, 1], [], []>} : vector<1x384xbf16>, vector<384x128xbf16>, vector<1x128xf32> -> vector<1x128xf32>
      %cst_31 = arith.constant 0.00333333341 : f32
      %42 = vector.broadcast %cst_31 : f32 to vector<1x128xf32>
      %43 = arith.mulf %41, %42 : vector<1x128xf32>
      %44 = arith.truncf %43 : vector<1x128xf32> to vector<1x128xbf16>
      %c0_32 = arith.constant 0 : index
      %c0_33 = arith.constant 0 : index
      %45 = vector.load %arg9[%c0_32, %c0_33] : memref<128x128xbf16, #tpu.memory_space<vmem>>, vector<128x128xbf16>
      %cst_34 = arith.constant dense<0.000000e+00> : vector<1x128xf32>
      %46 = tpu.matmul %44, %45, %cst_34 {dimension_numbers = #tpu.dot_dimension_numbers<[1], [0], [0], [1], [0, 0, 1, 1], [], []>} : vector<1x128xbf16>, vector<128x128xbf16>, vector<1x128xf32> -> vector<1x128xf32>
      %c0_35 = arith.constant 0 : index
      %c0_36 = arith.constant 0 : index
      %47 = vector.load %arg10[%c0_35, %c0_36] : memref<1x128xf32, #tpu.memory_space<vmem>>, vector<1x128xf32>
      %48 = arith.addf %46, %47 : vector<1x128xf32>
      %c0_37 = arith.constant 0 : index
      %c0_38 = arith.constant 0 : index
      %49 = vector.load %arg11[%c0_37, %c0_38] : memref<1x128xf32, #tpu.memory_space<vmem>>, vector<1x128xf32>
      %50 = arith.truncf %49 : vector<1x128xf32> to vector<1x128xbf16>
      %c0_39 = arith.constant 0 : index
      %c0_40 = arith.constant 0 : index
      %51 = vector.load %arg12[%c0_39, %c0_40] : memref<128x128xbf16, #tpu.memory_space<vmem>>, vector<128x128xbf16>
      %cst_41 = arith.constant dense<0.000000e+00> : vector<1x128xf32>
      %52 = tpu.matmul %50, %51, %cst_41 {dimension_numbers = #tpu.dot_dimension_numbers<[1], [0], [0], [1], [0, 0, 1, 1], [], []>} : vector<1x128xbf16>, vector<128x128xbf16>, vector<1x128xf32> -> vector<1x128xf32>
      %c0_42 = arith.constant 0 : index
      %c0_43 = arith.constant 0 : index
      %53 = vector.load %arg13[%c0_42, %c0_43] : memref<1x128xf32, #tpu.memory_space<vmem>>, vector<1x128xf32>
      %54 = arith.addf %52, %53 : vector<1x128xf32>
      %cst_44 = arith.constant 0.000000e+00 : f32
      %55 = vector.broadcast %cst_44 : f32 to vector<1x128xf32>
      %56 = arith.maximumf %54, %55 : vector<1x128xf32>
      %57 = arith.truncf %56 : vector<1x128xf32> to vector<1x128xbf16>
      %c0_45 = arith.constant 0 : index
      %c0_46 = arith.constant 0 : index
      %58 = vector.load %arg14[%c0_45, %c0_46] : memref<128x128xbf16, #tpu.memory_space<vmem>>, vector<128x128xbf16>
      %cst_47 = arith.constant dense<0.000000e+00> : vector<1x128xf32>
      %59 = tpu.matmul %57, %58, %cst_47 {dimension_numbers = #tpu.dot_dimension_numbers<[1], [0], [0], [1], [0, 0, 1, 1], [], []>} : vector<1x128xbf16>, vector<128x128xbf16>, vector<1x128xf32> -> vector<1x128xf32>
      %60 = arith.truncf %48 : vector<1x128xf32> to vector<1x128xbf16>
      %c0_48 = arith.constant 0 : index
      %c0_49 = arith.constant 0 : index
      %61 = vector.load %arg15[%c0_48, %c0_49] : memref<128x128xbf16, #tpu.memory_space<vmem>>, vector<128x128xbf16>
      %cst_50 = arith.constant dense<0.000000e+00> : vector<1x128xf32>
      %62 = tpu.matmul %60, %61, %cst_50 {dimension_numbers = #tpu.dot_dimension_numbers<[1], [0], [0], [1], [0, 0, 1, 1], [], []>} : vector<1x128xbf16>, vector<128x128xbf16>, vector<1x128xf32> -> vector<1x128xf32>
      %63 = arith.addf %59, %62 : vector<1x128xf32>
      %c0_51 = arith.constant 0 : index
      %c0_52 = arith.constant 0 : index
      %64 = vector.load %arg16[%c0_51, %c0_52] : memref<1x128xf32, #tpu.memory_space<vmem>>, vector<1x128xf32>
      %65 = arith.addf %63, %64 : vector<1x128xf32>
      %cst_53 = arith.constant 0.000000e+00 : f32
      %66 = vector.broadcast %cst_53 : f32 to vector<1x128xf32>
      %67 = arith.maximumf %65, %66 : vector<1x128xf32>
      %68 = arith.truncf %67 : vector<1x128xf32> to vector<1x128xbf16>
      %c0_54 = arith.constant 0 : index
      %c0_55 = arith.constant 0 : index
      %69 = vector.load %arg17[%c0_54, %c0_55] : memref<128x128xbf16, #tpu.memory_space<vmem>>, vector<128x128xbf16>
      %cst_56 = arith.constant dense<0.000000e+00> : vector<1x128xf32>
      %70 = tpu.matmul %68, %69, %cst_56 {dimension_numbers = #tpu.dot_dimension_numbers<[1], [0], [0], [1], [0, 0, 1, 1], [], []>} : vector<1x128xbf16>, vector<128x128xbf16>, vector<1x128xf32> -> vector<1x128xf32>
      %c0_57 = arith.constant 0 : index
      %c0_58 = arith.constant 0 : index
      %71 = vector.load %arg18[%c0_57, %c0_58] : memref<1x128xf32, #tpu.memory_space<vmem>>, vector<1x128xf32>
      %72 = arith.addf %70, %71 : vector<1x128xf32>
      %c0_59 = arith.constant 0 : index
      %c0_60 = arith.constant 0 : index
      %73 = vector.load %arg19[%c0_59, %c0_60] : memref<1x128xf32, #tpu.memory_space<vmem>>, vector<1x128xf32>
      tpu.vector_store %arg19[%c0_59, %c0_60], %72 {strides = array<i32>} : memref<1x128xf32, #tpu.memory_space<vmem>>, vector<1x128xf32>,
    } else {
    }
    return
  }
  func.func @transform_0(%arg0: i32) -> (i32, i32) {
    %c0_i32 = arith.constant 0 : i32
    %c0_i32_0 = arith.constant 0 : i32
    return %arg0, %c0_i32 : i32, i32
  }
  func.func @transform_1(%arg0: i32) -> (i32, i32, i32) {
    %c0_i32 = arith.constant 0 : i32
    %c0_i32_0 = arith.constant 0 : i32
    %c0_i32_1 = arith.constant 0 : i32
    return %arg0, %c0_i32, %c0_i32_0 : i32, i32, i32
  }
  func.func @transform_2(%arg0: i32) -> (i32, i32) {
    %c0_i32 = arith.constant 0 : i32
    %c0_i32_0 = arith.constant 0 : i32
    return %arg0, %c0_i32 : i32, i32
  }
  func.func @transform_3(%arg0: i32) -> (i32, i32) {
    %c0_i32 = arith.constant 0 : i32
    %c0_i32_0 = arith.constant 0 : i32
    %c0_i32_1 = arith.constant 0 : i32
    return %c0_i32, %c0_i32_0 : i32, i32
  }
  func.func @transform_4(%arg0: i32) -> (i32, i32) {
    %c0_i32 = arith.constant 0 : i32
    %c0_i32_0 = arith.constant 0 : i32
    %c0_i32_1 = arith.constant 0 : i32
    return %c0_i32, %c0_i32_0 : i32, i32
  }
  func.func @transform_5(%arg0: i32) -> (i32, i32) {
    %c0_i32 = arith.constant 0 : i32
    %c0_i32_0 = arith.constant 0 : i32
    %c0_i32_1 = arith.constant 0 : i32
    return %c0_i32, %c0_i32_0 : i32, i32
  }
  func.func @transform_6(%arg0: i32) -> (i32, i32) {
    %c0_i32 = arith.constant 0 : i32
    %c0_i32_0 = arith.constant 0 : i32
    %c0_i32_1 = arith.constant 0 : i32
    return %c0_i32, %c0_i32_0 : i32, i32
  }
  func.func @transform_7(%arg0: i32) -> (i32, i32) {
    %c0_i32 = arith.constant 0 : i32
    %c0_i32_0 = arith.constant 0 : i32
    %c0_i32_1 = arith.constant 0 : i32
    return %c0_i32, %c0_i32_0 : i32, i32
  }
  func.func @transform_8(%arg0: i32) -> (i32, i32) {
    %c0_i32 = arith.constant 0 : i32
    %c0_i32_0 = arith.constant 0 : i32
    %c0_i32_1 = arith.constant 0 : i32
    return %c0_i32, %c0_i32_0 : i32, i32
  }
  func.func @transform_9(%arg0: i32) -> (i32, i32) {
    %c0_i32 = arith.constant 0 : i32
    %c0_i32_0 = arith.constant 0 : i32
    %c0_i32_1 = arith.constant 0 : i32
    return %c0_i32, %c0_i32_0 : i32, i32
  }
  func.func @transform_10(%arg0: i32) -> (i32, i32) {
    %c0_i32 = arith.constant 0 : i32
    %c0_i32_0 = arith.constant 0 : i32
    %c0_i32_1 = arith.constant 0 : i32
    return %c0_i32, %c0_i32_0 : i32, i32
  }
  func.func @transform_11(%arg0: i32) -> (i32, i32) {
    %c0_i32 = arith.constant 0 : i32
    %c0_i32_0 = arith.constant 0 : i32
    %c0_i32_1 = arith.constant 0 : i32
    return %c0_i32, %c0_i32_0 : i32, i32
  }
  func.func @transform_12(%arg0: i32) -> (i32, i32) {
    %c0_i32 = arith.constant 0 : i32
    %c0_i32_0 = arith.constant 0 : i32
    %c0_i32_1 = arith.constant 0 : i32
    return %c0_i32, %c0_i32_0 : i32, i32
  }
  func.func @transform_13(%arg0: i32) -> (i32, i32) {
    %c0_i32 = arith.constant 0 : i32
    %c0_i32_0 = arith.constant 0 : i32
    %c0_i32_1 = arith.constant 0 : i32
    return %c0_i32, %c0_i32_0 : i32, i32
  }
  func.func @transform_14(%arg0: i32) -> (i32, i32) {
    %c0_i32 = arith.constant 0 : i32
    %c0_i32_0 = arith.constant 0 : i32
    %c0_i32_1 = arith.constant 0 : i32
    return %c0_i32, %c0_i32_0 : i32, i32
  }
  func.func @transform_15(%arg0: i32) -> (i32, i32) {
    %c0_i32 = arith.constant 0 : i32
    %c0_i32_0 = arith.constant 0 : i32
    %c0_i32_1 = arith.constant 0 : i32
    return %c0_i32, %c0_i32_0 : i32, i32
  }
  func.func @transform_16(%arg0: i32) -> (i32, i32) {
    %c0_i32 = arith.constant 0 : i32
    %c0_i32_0 = arith.constant 0 : i32
    %c0_i32_1 = arith.constant 0 : i32
    return %c0_i32, %c0_i32_0 : i32, i32
  }
  func.func @transform_17(%arg0: i32) -> (i32, i32) {
    %c0_i32 = arith.constant 0 : i32
    %c0_i32_0 = arith.constant 0 : i32
    %c0_i32_1 = arith.constant 0 : i32
    return %c0_i32, %c0_i32_0 : i32, i32
  }
  func.func @transform_18(%arg0: i32) -> (i32, i32) {
    %c0_i32 = arith.constant 0 : i32
    %c0_i32_0 = arith.constant 0 : i32
    %c0_i32_1 = arith.constant 0 : i32
    return %c0_i32, %c0_i32_0 : i32, i32
  }
}

</mosaic_0001>

<llo_original>
// kernel: fully_connected_graph_forward.1
$region0: #{fully_connected_graph_forward.1}
  #allocation0 [shape = 'u32[]', space=smem, size = 0x4, offset = 0x4, fixed_abs, tag = 'smem constant byte address 0x4 - core index']
  #allocation1 [shape = 'u32[144,128]{1,0:T(1,128)}', space=vmem, size = 0x12000, scoped, tag = 'internal scratch']
  #allocation2 [shape = 'f32[384,128]{1,0:T(8,128)}', space=vmem, size = 0x30000, scoped, tag = 'scratch operand']
  #allocation3 [shape = 'f32[1,384]{1,0:T(1,128)}', space=vmem, size = 0x600, scoped, tag = 'scratch operand']
  %s0 = inlined_call_operand.vmem [shape: bf16[384,384], index: 0, kind: input, shape index: {}]
  %s1 = inlined_call_operand.vmem [shape: f32[3,1,128], index: 1, kind: input, shape index: {}]
  %s2 = inlined_call_operand.vmem [shape: f32[384,1], index: 2, kind: input, shape index: {}]
  %s3 = inlined_call_operand.vmem [shape: f32[1,384], index: 3, kind: input, shape index: {}]
  %s4 = inlined_call_operand.vmem [shape: bf16[384,128], index: 4, kind: input, shape index: {}]
  %s5 = inlined_call_operand.vmem [shape: f32[384,128], index: 5, kind: input, shape index: {}]
  %s6 = inlined_call_operand.vmem [shape: bf16[128,128], index: 6, kind: input, shape index: {}]
  %s7 = inlined_call_operand.vmem [shape: f32[1,128], index: 7, kind: input, shape index: {}]
  %s8 = inlined_call_operand.vmem [shape: bf16[128,128], index: 8, kind: input, shape index: {}]
  %s9 = inlined_call_operand.vmem [shape: f32[1,128], index: 9, kind: input, shape index: {}]
  %s10 = inlined_call_operand.vmem [shape: f32[1,128], index: 10, kind: input, shape index: {}]
  %s11 = inlined_call_operand.vmem [shape: bf16[128,128], index: 11, kind: input, shape index: {}]
  %s12 = inlined_call_operand.vmem [shape: f32[1,128], index: 12, kind: input, shape index: {}]
  %s13 = inlined_call_operand.vmem [shape: bf16[128,128], index: 13, kind: input, shape index: {}]
  %s14 = inlined_call_operand.vmem [shape: bf16[128,128], index: 14, kind: input, shape index: {}]
  %s15 = inlined_call_operand.vmem [shape: f32[1,128], index: 15, kind: input, shape index: {}]
  %s16 = inlined_call_operand.vmem [shape: bf16[128,128], index: 16, kind: input, shape index: {}]
  %s17 = inlined_call_operand.vmem [shape: f32[1,128], index: 17, kind: input, shape index: {}]
  %s18 = inlined_call_operand.vmem [shape: f32[1,128], index: 18, kind: output, shape index: {}]
  %s19 = sld [smem:[#allocation0]]
  $region113: #{fully_connected_graph_forward.1} parent=0
    _
  %s21 = ssub.s32 1, %s19
  %s22 = scalar_select 0, %s21, %s19
  loop: start=0, step=1, limit=5
  $region2: #{fully_connected_graph_forward.1} parent=0 // loop_pre_header
    _
  $region3: #{fully_connected_graph_forward.1} parent=0 // loop_header
    %s24 = sphi 0, %s28
    %p25 = scmp.ge.s32.totalorder %s24, 5
    %s34 = sphi 0, %s36
    %s37 = sphi 0, %s34
    %s38 = sphi 0, %s37
    %s54 = sphi 0, %s38
    %s60 = sphi 0, %s62
    %s63 = sphi 0, %s60
    %s64 = sphi 0, %s63
    %s80 = sphi 0, %s64
    %s86 = sphi 0, %s88
    %s89 = sphi 0, %s86
    %s90 = sphi 0, %s89
    %s106 = sphi 0, %s90
    %s110 = sphi 0, %s110
    %s112 = sphi 0, %s110
    %s113 = sphi 0, %s112
    %s127 = sphi 0, %s113
    %s131 = sphi 0, %s131
    %s133 = sphi 0, %s131
    %s134 = sphi 0, %s133
    %s148 = sphi 0, %s134
    %s152 = sphi 0, %s152
    %s154 = sphi 0, %s152
    %s155 = sphi 0, %s154
    %s169 = sphi 0, %s155
    %s173 = sphi 0, %s173
    %s175 = sphi 0, %s173
    %s176 = sphi 0, %s175
    %s190 = sphi 0, %s176
    %s194 = sphi 0, %s194
    %s196 = sphi 0, %s194
    %s197 = sphi 0, %s196
    %s211 = sphi 0, %s197
    %s215 = sphi 0, %s215
    %s217 = sphi 0, %s215
    %s218 = sphi 0, %s217
    %s232 = sphi 0, %s218
    %s236 = sphi 0, %s236
    %s238 = sphi 0, %s236
    %s239 = sphi 0, %s238
    %s253 = sphi 0, %s239
    %s257 = sphi 0, %s257
    %s259 = sphi 0, %s257
    %s260 = sphi 0, %s259
    %s274 = sphi 0, %s260
    %s278 = sphi 0, %s278
    %s280 = sphi 0, %s278
    %s281 = sphi 0, %s280
    %s295 = sphi 0, %s281
    %s299 = sphi 0, %s299
    %s301 = sphi 0, %s299
    %s302 = sphi 0, %s301
    %s316 = sphi 0, %s302
    %s320 = sphi 0, %s320
    %s322 = sphi 0, %s320
    %s323 = sphi 0, %s322
    %s337 = sphi 0, %s323
    %s341 = sphi 0, %s341
    %s343 = sphi 0, %s341
    %s344 = sphi 0, %s343
    %s358 = sphi 0, %s344
    %s362 = sphi 0, %s362
    %s364 = sphi 0, %s362
    %s365 = sphi 0, %s364
    %s379 = sphi 0, %s365
    %s383 = sphi 0, %s383
    %s385 = sphi 0, %s383
    %s386 = sphi 0, %s385
    %s400 = sphi 0, %s386
    %s404 = sphi 0, %s404
    %s406 = sphi 0, %s404
    %s407 = sphi 0, %s406
    %s421 = sphi 0, %s407
    %s425 = sphi 0, %s425
    %s427 = sphi 0, %s425
    %s428 = sphi 0, %s427
    %s442 = sphi 0, %s428
  $region4: #{fully_connected_graph_forward.1} parent=0 // loop_header_branch
    %27 = sbr.rel (%p25) target = $region8
  $region5: #{fully_connected_graph_forward.1} parent=0 // loop_body
    %s29 = ssub.s32 %s24, 1
    %s30 = ssub.s32 %s24, 2
    %s31 = sadd.s32 %s24, 1
    %s32 = ssub.s32 %s24, %s31
    %p33 = scmp.eq.s32.totalorder %s32, 0
    %s35 = sadd.s32 %s34, 1
    %s36 = scalar_select %p33, %s34, %s35
    %p39 = pneg %p33
    %p40 = scmp.eq.s32.totalorder %s24, 2
    %p41 = por %p39, %p40
    %p42 = scmp.ne.s32.totalorder %s34, %s37
    %p43 = scmp.eq.s32.totalorder %s24, 0
    %p44 = por %p42, %p43
    %p45 = scmp.ne.s32.totalorder %s34, %s37
    %p46 = scmp.eq.s32.totalorder %s29, 2
    %p47 = por %p45, %p46
    %p48 = scmp.ne.s32.totalorder %s37, %s38
    %p49 = scmp.eq.s32.totalorder %s29, 0
    %p50 = por %p48, %p49
    %p51 = scmp.ne.s32.totalorder %s37, %s38
    %p52 = scmp.eq.s32.totalorder %s30, 2
    %p53 = por %p51, %p52
    %p55 = scmp.ne.s32.totalorder %s38, %s54
    %p56 = scmp.eq.s32.totalorder %s30, 0
    %p57 = por %p55, %p56
    %s58 = ssub.s32 %s24, %s31
    %p59 = scmp.eq.s32.totalorder %s58, 0
    %s61 = sadd.s32 %s60, 1
    %s62 = scalar_select %p59, %s60, %s61
    %p65 = pneg %p59
    %p66 = scmp.eq.s32.totalorder %s24, 2
    %p67 = por %p65, %p66
    %p68 = scmp.ne.s32.totalorder %s60, %s63
    %p69 = scmp.eq.s32.totalorder %s24, 0
    %p70 = por %p68, %p69
    %p71 = scmp.ne.s32.totalorder %s60, %s63
    %p72 = scmp.eq.s32.totalorder %s29, 2
    %p73 = por %p71, %p72
    %p74 = scmp.ne.s32.totalorder %s63, %s64
    %p75 = scmp.eq.s32.totalorder %s29, 0
    %p76 = por %p74, %p75
    %p77 = scmp.ne.s32.totalorder %s63, %s64
    %p78 = scmp.eq.s32.totalorder %s30, 2
    %p79 = por %p77, %p78
    %p81 = scmp.ne.s32.totalorder %s64, %s80
    %p82 = scmp.eq.s32.totalorder %s30, 0
    %p83 = por %p81, %p82
    %s84 = ssub.s32 %s24, %s31
    %p85 = scmp.eq.s32.totalorder %s84, 0
    %s87 = sadd.s32 %s86, 1
    %s88 = scalar_select %p85, %s86, %s87
    %p91 = pneg %p85
    %p92 = scmp.eq.s32.totalorder %s24, 2
    %p93 = por %p91, %p92
    %p94 = scmp.ne.s32.totalorder %s86, %s89
    %p95 = scmp.eq.s32.totalorder %s24, 0
    %p96 = por %p94, %p95
    %p97 = scmp.ne.s32.totalorder %s86, %s89
    %p98 = scmp.eq.s32.totalorder %s29, 2
    %p99 = por %p97, %p98
    %p100 = scmp.ne.s32.totalorder %s89, %s90
    %p101 = scmp.eq.s32.totalorder %s29, 0
    %p102 = por %p100, %p101
    %p103 = scmp.ne.s32.totalorder %s89, %s90
    %p104 = scmp.eq.s32.totalorder %s30, 2
    %p105 = por %p103, %p104
    %p107 = scmp.ne.s32.totalorder %s90, %s106
    %p108 = scmp.eq.s32.totalorder %s30, 0
    %p109 = por %p107, %p108
    %s111 = sadd.s32 %s110, 1
    %p114 = scmp.eq.s32.totalorder %s24, 2
    %p115 = scmp.ne.s32.totalorder %s110, %s112
    %p116 = scmp.eq.s32.totalorder %s24, 0
    %p117 = por %p115, %p116
    %p118 = scmp.ne.s32.totalorder %s110, %s112
    %p119 = scmp.eq.s32.totalorder %s29, 2
    %p120 = por %p118, %p119
    %p121 = scmp.ne.s32.totalorder %s112, %s113
    %p122 = scmp.eq.s32.totalorder %s29, 0
    %p123 = por %p121, %p122
    %p124 = scmp.ne.s32.totalorder %s112, %s113
    %p125 = scmp.eq.s32.totalorder %s30, 2
    %p126 = por %p124, %p125
    %p128 = scmp.ne.s32.totalorder %s113, %s127
    %p129 = scmp.eq.s32.totalorder %s30, 0
    %p130 = por %p128, %p129
    %s132 = sadd.s32 %s131, 1
    %p135 = scmp.eq.s32.totalorder %s24, 2
    %p136 = scmp.ne.s32.totalorder %s131, %s133
    %p137 = scmp.eq.s32.totalorder %s24, 0
    %p138 = por %p136, %p137
    %p139 = scmp.ne.s32.totalorder %s131, %s133
    %p140 = scmp.eq.s32.totalorder %s29, 2
    %p141 = por %p139, %p140
    %p142 = scmp.ne.s32.totalorder %s133, %s134
    %p143 = scmp.eq.s32.totalorder %s29, 0
    %p144 = por %p142, %p143
    %p145 = scmp.ne.s32.totalorder %s133, %s134
    %p146 = scmp.eq.s32.totalorder %s30, 2
    %p147 = por %p145, %p146
    %p149 = scmp.ne.s32.totalorder %s134, %s148
    %p150 = scmp.eq.s32.totalorder %s30, 0
    %p151 = por %p149, %p150
    %s153 = sadd.s32 %s152, 1
    %p156 = scmp.eq.s32.totalorder %s24, 2
    %p157 = scmp.ne.s32.totalorder %s152, %s154
    %p158 = scmp.eq.s32.totalorder %s24, 0
    %p159 = por %p157, %p158
    %p160 = scmp.ne.s32.totalorder %s152, %s154
    %p161 = scmp.eq.s32.totalorder %s29, 2
    %p162 = por %p160, %p161
    %p163 = scmp.ne.s32.totalorder %s154, %s155
    %p164 = scmp.eq.s32.totalorder %s29, 0
    %p165 = por %p163, %p164
    %p166 = scmp.ne.s32.totalorder %s154, %s155
    %p167 = scmp.eq.s32.totalorder %s30, 2
    %p168 = por %p166, %p167
    %p170 = scmp.ne.s32.totalorder %s155, %s169
    %p171 = scmp.eq.s32.totalorder %s30, 0
    %p172 = por %p170, %p171
    %s174 = sadd.s32 %s173, 1
    %p177 = scmp.eq.s32.totalorder %s24, 2
    %p178 = scmp.ne.s32.totalorder %s173, %s175
    %p179 = scmp.eq.s32.totalorder %s24, 0
    %p180 = por %p178, %p179
    %p181 = scmp.ne.s32.totalorder %s173, %s175
    %p182 = scmp.eq.s32.totalorder %s29, 2
    %p183 = por %p181, %p182
    %p184 = scmp.ne.s32.totalorder %s175, %s176
    %p185 = scmp.eq.s32.totalorder %s29, 0
    %p186 = por %p184, %p185
    %p187 = scmp.ne.s32.totalorder %s175, %s176
    %p188 = scmp.eq.s32.totalorder %s30, 2
    %p189 = por %p187, %p188
    %p191 = scmp.ne.s32.totalorder %s176, %s190
    %p192 = scmp.eq.s32.totalorder %s30, 0
    %p193 = por %p191, %p192
    %s195 = sadd.s32 %s194, 1
    %p198 = scmp.eq.s32.totalorder %s24, 2
    %p199 = scmp.ne.s32.totalorder %s194, %s196
    %p200 = scmp.eq.s32.totalorder %s24, 0
    %p201 = por %p199, %p200
    %p202 = scmp.ne.s32.totalorder %s194, %s196
    %p203 = scmp.eq.s32.totalorder %s29, 2
    %p204 = por %p202, %p203
    %p205 = scmp.ne.s32.totalorder %s196, %s197
    %p206 = scmp.eq.s32.totalorder %s29, 0
    %p207 = por %p205, %p206
    %p208 = scmp.ne.s32.totalorder %s196, %s197
    %p209 = scmp.eq.s32.totalorder %s30, 2
    %p210 = por %p208, %p209
    %p212 = scmp.ne.s32.totalorder %s197, %s211
    %p213 = scmp.eq.s32.totalorder %s30, 0
    %p214 = por %p212, %p213
    %s216 = sadd.s32 %s215, 1
    %p219 = scmp.eq.s32.totalorder %s24, 2
    %p220 = scmp.ne.s32.totalorder %s215, %s217
    %p221 = scmp.eq.s32.totalorder %s24, 0
    %p222 = por %p220, %p221
    %p223 = scmp.ne.s32.totalorder %s215, %s217
    %p224 = scmp.eq.s32.totalorder %s29, 2
    %p225 = por %p223, %p224
    %p226 = scmp.ne.s32.totalorder %s217, %s218
    %p227 = scmp.eq.s32.totalorder %s29, 0
    %p228 = por %p226, %p227
    %p229 = scmp.ne.s32.totalorder %s217, %s218
    %p230 = scmp.eq.s32.totalorder %s30, 2
    %p231 = por %p229, %p230
    %p233 = scmp.ne.s32.totalorder %s218, %s232
    %p234 = scmp.eq.s32.totalorder %s30, 0
    %p235 = por %p233, %p234
    %s237 = sadd.s32 %s236, 1
    %p240 = scmp.eq.s32.totalorder %s24, 2
    %p241 = scmp.ne.s32.totalorder %s236, %s238
    %p242 = scmp.eq.s32.totalorder %s24, 0
    %p243 = por %p241, %p242
    %p244 = scmp.ne.s32.totalorder %s236, %s238
    %p245 = scmp.eq.s32.totalorder %s29, 2
    %p246 = por %p244, %p245
    %p247 = scmp.ne.s32.totalorder %s238, %s239
    %p248 = scmp.eq.s32.totalorder %s29, 0
    %p249 = por %p247, %p248
    %p250 = scmp.ne.s32.totalorder %s238, %s239
    %p251 = scmp.eq.s32.totalorder %s30, 2
    %p252 = por %p250, %p251
    %p254 = scmp.ne.s32.totalorder %s239, %s253
    %p255 = scmp.eq.s32.totalorder %s30, 0
    %p256 = por %p254, %p255
    %s258 = sadd.s32 %s257, 1
    %p261 = scmp.eq.s32.totalorder %s24, 2
    %p262 = scmp.ne.s32.totalorder %s257, %s259
    %p263 = scmp.eq.s32.totalorder %s24, 0
    %p264 = por %p262, %p263
    %p265 = scmp.ne.s32.totalorder %s257, %s259
    %p266 = scmp.eq.s32.totalorder %s29, 2
    %p267 = por %p265, %p266
    %p268 = scmp.ne.s32.totalorder %s259, %s260
    %p269 = scmp.eq.s32.totalorder %s29, 0
    %p270 = por %p268, %p269
    %p271 = scmp.ne.s32.totalorder %s259, %s260
    %p272 = scmp.eq.s32.totalorder %s30, 2
    %p273 = por %p271, %p272
    %p275 = scmp.ne.s32.totalorder %s260, %s274
    %p276 = scmp.eq.s32.totalorder %s30, 0
    %p277 = por %p275, %p276
    %s279 = sadd.s32 %s278, 1
    %p282 = scmp.eq.s32.totalorder %s24, 2
    %p283 = scmp.ne.s32.totalorder %s278, %s280
    %p284 = scmp.eq.s32.totalorder %s24, 0
    %p285 = por %p283, %p284
    %p286 = scmp.ne.s32.totalorder %s278, %s280
    %p287 = scmp.eq.s32.totalorder %s29, 2
    %p288 = por %p286, %p287
    %p289 = scmp.ne.s32.totalorder %s280, %s281
    %p290 = scmp.eq.s32.totalorder %s29, 0
    %p291 = por %p289, %p290
    %p292 = scmp.ne.s32.totalorder %s280, %s281
    %p293 = scmp.eq.s32.totalorder %s30, 2
    %p294 = por %p292, %p293
    %p296 = scmp.ne.s32.totalorder %s281, %s295
    %p297 = scmp.eq.s32.totalorder %s30, 0
    %p298 = por %p296, %p297
    %s300 = sadd.s32 %s299, 1
    %p303 = scmp.eq.s32.totalorder %s24, 2
    %p304 = scmp.ne.s32.totalorder %s299, %s301
    %p305 = scmp.eq.s32.totalorder %s24, 0
    %p306 = por %p304, %p305
    %p307 = scmp.ne.s32.totalorder %s299, %s301
    %p308 = scmp.eq.s32.totalorder %s29, 2
    %p309 = por %p307, %p308
    %p310 = scmp.ne.s32.totalorder %s301, %s302
    %p311 = scmp.eq.s32.totalorder %s29, 0
    %p312 = por %p310, %p311
    %p313 = scmp.ne.s32.totalorder %s301, %s302
    %p314 = scmp.eq.s32.totalorder %s30, 2
    %p315 = por %p313, %p314
    %p317 = scmp.ne.s32.totalorder %s302, %s316
    %p318 = scmp.eq.s32.totalorder %s30, 0
    %p319 = por %p317, %p318
    %s321 = sadd.s32 %s320, 1
    %p324 = scmp.eq.s32.totalorder %s24, 2
    %p325 = scmp.ne.s32.totalorder %s320, %s322
    %p326 = scmp.eq.s32.totalorder %s24, 0
    %p327 = por %p325, %p326
    %p328 = scmp.ne.s32.totalorder %s320, %s322
    %p329 = scmp.eq.s32.totalorder %s29, 2
    %p330 = por %p328, %p329
    %p331 = scmp.ne.s32.totalorder %s322, %s323
    %p332 = scmp.eq.s32.totalorder %s29, 0
    %p333 = por %p331, %p332
    %p334 = scmp.ne.s32.totalorder %s322, %s323
    %p335 = scmp.eq.s32.totalorder %s30, 2
    %p336 = por %p334, %p335
    %p338 = scmp.ne.s32.totalorder %s323, %s337
    %p339 = scmp.eq.s32.totalorder %s30, 0
    %p340 = por %p338, %p339
    %s342 = sadd.s32 %s341, 1
    %p345 = scmp.eq.s32.totalorder %s24, 2
    %p346 = scmp.ne.s32.totalorder %s341, %s343
    %p347 = scmp.eq.s32.totalorder %s24, 0
    %p348 = por %p346, %p347
    %p349 = scmp.ne.s32.totalorder %s341, %s343
    %p350 = scmp.eq.s32.totalorder %s29, 2
    %p351 = por %p349, %p350
    %p352 = scmp.ne.s32.totalorder %s343, %s344
    %p353 = scmp.eq.s32.totalorder %s29, 0
    %p354 = por %p352, %p353
    %p355 = scmp.ne.s32.totalorder %s343, %s344
    %p356 = scmp.eq.s32.totalorder %s30, 2
    %p357 = por %p355, %p356
    %p359 = scmp.ne.s32.totalorder %s344, %s358
    %p360 = scmp.eq.s32.totalorder %s30, 0
    %p361 = por %p359, %p360
    %s363 = sadd.s32 %s362, 1
    %p366 = scmp.eq.s32.totalorder %s24, 2
    %p367 = scmp.ne.s32.totalorder %s362, %s364
    %p368 = scmp.eq.s32.totalorder %s24, 0
    %p369 = por %p367, %p368
    %p370 = scmp.ne.s32.totalorder %s362, %s364
    %p371 = scmp.eq.s32.totalorder %s29, 2
    %p372 = por %p370, %p371
    %p373 = scmp.ne.s32.totalorder %s364, %s365
    %p374 = scmp.eq.s32.totalorder %s29, 0
    %p375 = por %p373, %p374
    %p376 = scmp.ne.s32.totalorder %s364, %s365
    %p377 = scmp.eq.s32.totalorder %s30, 2
    %p378 = por %p376, %p377
    %p380 = scmp.ne.s32.totalorder %s365, %s379
    %p381 = scmp.eq.s32.totalorder %s30, 0
    %p382 = por %p380, %p381
    %s384 = sadd.s32 %s383, 1
    %p387 = scmp.eq.s32.totalorder %s24, 2
    %p388 = scmp.ne.s32.totalorder %s383, %s385
    %p389 = scmp.eq.s32.totalorder %s24, 0
    %p390 = por %p388, %p389
    %p391 = scmp.ne.s32.totalorder %s383, %s385
    %p392 = scmp.eq.s32.totalorder %s29, 2
    %p393 = por %p391, %p392
    %p394 = scmp.ne.s32.totalorder %s385, %s386
    %p395 = scmp.eq.s32.totalorder %s29, 0
    %p396 = por %p394, %p395
    %p397 = scmp.ne.s32.totalorder %s385, %s386
    %p398 = scmp.eq.s32.totalorder %s30, 2
    %p399 = por %p397, %p398
    %p401 = scmp.ne.s32.totalorder %s386, %s400
    %p402 = scmp.eq.s32.totalorder %s30, 0
    %p403 = por %p401, %p402
    %s405 = sadd.s32 %s404, 1
    %p408 = scmp.eq.s32.totalorder %s24, 2
    %p409 = scmp.ne.s32.totalorder %s404, %s406
    %p410 = scmp.eq.s32.totalorder %s24, 0
    %p411 = por %p409, %p410
    %p412 = scmp.ne.s32.totalorder %s404, %s406
    %p413 = scmp.eq.s32.totalorder %s29, 2
    %p414 = por %p412, %p413
    %p415 = scmp.ne.s32.totalorder %s406, %s407
    %p416 = scmp.eq.s32.totalorder %s29, 0
    %p417 = por %p415, %p416
    %p418 = scmp.ne.s32.totalorder %s406, %s407
    %p419 = scmp.eq.s32.totalorder %s30, 2
    %p420 = por %p418, %p419
    %p422 = scmp.ne.s32.totalorder %s407, %s421
    %p423 = scmp.eq.s32.totalorder %s30, 0
    %p424 = por %p422, %p423
    %s426 = sadd.s32 %s425, 1
    %p429 = scmp.eq.s32.totalorder %s24, 2
    %p430 = scmp.ne.s32.totalorder %s425, %s427
    %p431 = scmp.eq.s32.totalorder %s24, 0
    %p432 = por %p430, %p431
    %p433 = scmp.ne.s32.totalorder %s425, %s427
    %p434 = scmp.eq.s32.totalorder %s29, 2
    %p435 = por %p433, %p434
    %p436 = scmp.ne.s32.totalorder %s427, %s428
    %p437 = scmp.eq.s32.totalorder %s29, 0
    %p438 = por %p436, %p437
    %p439 = scmp.ne.s32.totalorder %s427, %s428
    %p440 = scmp.eq.s32.totalorder %s30, 2
    %p441 = por %p439, %p440
    %p443 = scmp.ne.s32.totalorder %s428, %s442
    %p444 = scmp.eq.s32.totalorder %s30, 0
    %p445 = por %p443, %p444
    %p446 = scmp.le.s32.totalorder 1, %s24
    %p447 = scmp.lt.s32.totalorder %s24, 4
    %p448 = pnand %p446, %p447
    %p449 = pneg %p448
    // Predicated region
    $region9: #{fully_connected_graph_forward.1} parent=5 // pred_check
      _
    $region10: #{fully_connected_graph_forward.1} parent=5 // pred_check_branch
      %451 = sbr.rel (%p448) target = $region12
    $region11: #{fully_connected_graph_forward.1} parent=5 // pred_region
      %s452 = ssub.s32 %s24, 1
      // Predicated region
      $region13: #{fully_connected_graph_forward.1} parent=11 // pred_check
        %p453 = pneg %p123
      $region14: #{fully_connected_graph_forward.1} parent=11 // pred_check_branch
        %455 = sbr.rel (%p453) target = $region16
      $region15: #{fully_connected_graph_forward.1} parent=11 // pred_region
        _
      $region16: #{fully_connected_graph_forward.1} parent=11 // pred_fallthru
        _
      // Predicated region
      $region17: #{fully_connected_graph_forward.1} parent=11 // pred_check
        %p456 = pneg %p144
      $region18: #{fully_connected_graph_forward.1} parent=11 // pred_check_branch
        %458 = sbr.rel (%p456) target = $region20
      $region19: #{fully_connected_graph_forward.1} parent=11 // pred_region
        _
      $region20: #{fully_connected_graph_forward.1} parent=11 // pred_fallthru
        _
      // Predicated region
      $region21: #{fully_connected_graph_forward.1} parent=11 // pred_check
        %p459 = pneg %p165
      $region22: #{fully_connected_graph_forward.1} parent=11 // pred_check_branch
        %461 = sbr.rel (%p459) target = $region24
      $region23: #{fully_connected_graph_forward.1} parent=11 // pred_region
        _
      $region24: #{fully_connected_graph_forward.1} parent=11 // pred_fallthru
        _
      // Predicated region
      $region25: #{fully_connected_graph_forward.1} parent=11 // pred_check
        %p462 = pneg %p186
      $region26: #{fully_connected_graph_forward.1} parent=11 // pred_check_branch
        %464 = sbr.rel (%p462) target = $region28
      $region27: #{fully_connected_graph_forward.1} parent=11 // pred_region
        _
      $region28: #{fully_connected_graph_forward.1} parent=11 // pred_fallthru
        _
      // Predicated region
      $region29: #{fully_connected_graph_forward.1} parent=11 // pred_check
        %p465 = pneg %p207
      $region30: #{fully_connected_graph_forward.1} parent=11 // pred_check_branch
        %467 = sbr.rel (%p465) target = $region32
      $region31: #{fully_connected_graph_forward.1} parent=11 // pred_region
        _
      $region32: #{fully_connected_graph_forward.1} parent=11 // pred_fallthru
        _
      // Predicated region
      $region33: #{fully_connected_graph_forward.1} parent=11 // pred_check
        %p468 = pneg %p228
      $region34: #{fully_connected_graph_forward.1} parent=11 // pred_check_branch
        %470 = sbr.rel (%p468) target = $region36
      $region35: #{fully_connected_graph_forward.1} parent=11 // pred_region
        _
      $region36: #{fully_connected_graph_forward.1} parent=11 // pred_fallthru
        _
      // Predicated region
      $region37: #{fully_connected_graph_forward.1} parent=11 // pred_check
        %p471 = pneg %p249
      $region38: #{fully_connected_graph_forward.1} parent=11 // pred_check_branch
        %473 = sbr.rel (%p471) target = $region40
      $region39: #{fully_connected_graph_forward.1} parent=11 // pred_region
        _
      $region40: #{fully_connected_graph_forward.1} parent=11 // pred_fallthru
        _
      // Predicated region
      $region41: #{fully_connected_graph_forward.1} parent=11 // pred_check
        %p474 = pneg %p270
      $region42: #{fully_connected_graph_forward.1} parent=11 // pred_check_branch
        %476 = sbr.rel (%p474) target = $region44
      $region43: #{fully_connected_graph_forward.1} parent=11 // pred_region
        _
      $region44: #{fully_connected_graph_forward.1} parent=11 // pred_fallthru
        _
      // Predicated region
      $region45: #{fully_connected_graph_forward.1} parent=11 // pred_check
        %p477 = pneg %p291
      $region46: #{fully_connected_graph_forward.1} parent=11 // pred_check_branch
        %479 = sbr.rel (%p477) target = $region48
      $region47: #{fully_connected_graph_forward.1} parent=11 // pred_region
        _
      $region48: #{fully_connected_graph_forward.1} parent=11 // pred_fallthru
        _
      // Predicated region
      $region49: #{fully_connected_graph_forward.1} parent=11 // pred_check
        %p480 = pneg %p312
      $region50: #{fully_connected_graph_forward.1} parent=11 // pred_check_branch
        %482 = sbr.rel (%p480) target = $region52
      $region51: #{fully_connected_graph_forward.1} parent=11 // pred_region
        _
      $region52: #{fully_connected_graph_forward.1} parent=11 // pred_fallthru
        _
      // Predicated region
      $region53: #{fully_connected_graph_forward.1} parent=11 // pred_check
        %p483 = pneg %p333
      $region54: #{fully_connected_graph_forward.1} parent=11 // pred_check_branch
        %485 = sbr.rel (%p483) target = $region56
      $region55: #{fully_connected_graph_forward.1} parent=11 // pred_region
        _
      $region56: #{fully_connected_graph_forward.1} parent=11 // pred_fallthru
        _
      // Predicated region
      $region57: #{fully_connected_graph_forward.1} parent=11 // pred_check
        %p486 = pneg %p354
      $region58: #{fully_connected_graph_forward.1} parent=11 // pred_check_branch
        %488 = sbr.rel (%p486) target = $region60
      $region59: #{fully_connected_graph_forward.1} parent=11 // pred_region
        _
      $region60: #{fully_connected_graph_forward.1} parent=11 // pred_fallthru
        _
      // Predicated region
      $region61: #{fully_connected_graph_forward.1} parent=11 // pred_check
        %p489 = pneg %p375
      $region62: #{fully_connected_graph_forward.1} parent=11 // pred_check_branch
        %491 = sbr.rel (%p489) target = $region64
      $region63: #{fully_connected_graph_forward.1} parent=11 // pred_region
        _
      $region64: #{fully_connected_graph_forward.1} parent=11 // pred_fallthru
        _
      // Predicated region
      $region65: #{fully_connected_graph_forward.1} parent=11 // pred_check
        %p492 = pneg %p396
      $region66: #{fully_connected_graph_forward.1} parent=11 // pred_check_branch
        %494 = sbr.rel (%p492) target = $region68
      $region67: #{fully_connected_graph_forward.1} parent=11 // pred_region
        _
      $region68: #{fully_connected_graph_forward.1} parent=11 // pred_fallthru
        _
      // Predicated region
      $region69: #{fully_connected_graph_forward.1} parent=11 // pred_check
        %p495 = pneg %p417
      $region70: #{fully_connected_graph_forward.1} parent=11 // pred_check_branch
        %497 = sbr.rel (%p495) target = $region72
      $region71: #{fully_connected_graph_forward.1} parent=11 // pred_region
        _
      $region72: #{fully_connected_graph_forward.1} parent=11 // pred_fallthru
        _
    $region12: #{fully_connected_graph_forward.1} parent=5 // pred_fallthru
      _
    %p498 = scmp.lt.s32.totalorder %s24, 3
    // Predicated region
    $region73: #{fully_connected_graph_forward.1} parent=5 // pred_check
      %p499 = pneg %p498
    $region74: #{fully_connected_graph_forward.1} parent=5 // pred_check_branch
      %501 = sbr.rel (%p499) target = $region76
    $region75: #{fully_connected_graph_forward.1} parent=5 // pred_region
      // Predicated region
      $region77: #{fully_connected_graph_forward.1} parent=75 // pred_check
        %p502 = pneg %p44
      $region78: #{fully_connected_graph_forward.1} parent=75 // pred_check_branch
        %504 = sbr.rel (%p502) target = $region80
      $region79: #{fully_connected_graph_forward.1} parent=75 // pred_region
        %s505 = smul.u32 16, %s24
        %p506 = scmp.lt.s32.totalorder %s505, 47
        %s507 = scalar_select %p506, %s505, 47
        %s508 = smul.addr %s507, 3
        %s509 = smul.addr %s508, 4
        %s510 = scalar_lea.vmem %s0, %s509
        %s511 = smul.u32 16, %s24
      $region80: #{fully_connected_graph_forward.1} parent=75 // pred_fallthru
        _
      // Predicated region
      $region81: #{fully_connected_graph_forward.1} parent=75 // pred_check
        %p512 = pneg %p70
      $region82: #{fully_connected_graph_forward.1} parent=75 // pred_check_branch
        %514 = sbr.rel (%p512) target = $region84
      $region83: #{fully_connected_graph_forward.1} parent=75 // pred_region
        %p515 = scmp.lt.s32.totalorder %s24, 2
        %s516 = scalar_select %p515, %s24, 2
        %s517 = scalar_lea.vmem %s1, %s516
      $region84: #{fully_connected_graph_forward.1} parent=75 // pred_fallthru
        _
      // Predicated region
      $region85: #{fully_connected_graph_forward.1} parent=75 // pred_check
        %p518 = pneg %p96
      $region86: #{fully_connected_graph_forward.1} parent=75 // pred_check_branch
        %520 = sbr.rel (%p518) target = $region88
      $region87: #{fully_connected_graph_forward.1} parent=75 // pred_region
        %s521 = smul.u32 16, %s24
        %p522 = scmp.lt.s32.totalorder %s521, 47
        %s523 = scalar_select %p522, %s521, 47
        %s524 = smul.addr %s523, 8
        %s525 = scalar_lea.vmem %s2, %s524
        %s526 = smul.u32 16, %s24
      $region88: #{fully_connected_graph_forward.1} parent=75 // pred_fallthru
        _
    $region76: #{fully_connected_graph_forward.1} parent=5 // pred_fallthru
      _
    %p527 = scmp.le.s32.totalorder 1, %s24
    %p528 = scmp.lt.s32.totalorder %s24, 4
    %p529 = pnand %p527, %p528
    %p530 = pneg %p529
    // Predicated region
    $region89: #{fully_connected_graph_forward.1} parent=5 // pred_check
      _
    $region90: #{fully_connected_graph_forward.1} parent=5 // pred_check_branch
      %532 = sbr.rel (%p529) target = $region92
    $region91: #{fully_connected_graph_forward.1} parent=5 // pred_region
      %s533 = ssub.s32 %s24, 1
      %s534 = smul.u32 16, %s29
      %p535 = scmp.lt.s32.totalorder %s534, 47
      %s536 = scalar_select %p535, %s534, 47
      %s537 = smul.addr %s536, 3
      %s538 = smul.addr %s537, 4
      %s539 = scalar_lea.vmem %s0, %s538
      %p540 = pneg %p50
      %p541 = pneg %p47
      %p542 = scmp.lt.s32.totalorder %s29, 2
      %s543 = scalar_select %p542, %s29, 2
      %s544 = scalar_lea.vmem %s1, %s543
      %p545 = pneg %p76
      %p546 = pneg %p73
      %s547 = smul.u32 16, %s29
      %p548 = scmp.lt.s32.totalorder %s547, 47
      %s549 = scalar_select %p548, %s547, 47
      %s550 = smul.addr %s549, 8
      %s551 = scalar_lea.vmem %s2, %s550
      %p552 = pneg %p102
      %p553 = pneg %p99
      %p554 = pneg %p123
      %p555 = pneg %p120
      %p556 = pneg %p144
      %p557 = pneg %p141
      %p558 = pneg %p165
      %p559 = pneg %p162
      %p560 = pneg %p186
      %p561 = pneg %p183
      %p562 = pneg %p207
      %p563 = pneg %p204
      %p564 = pneg %p228
      %p565 = pneg %p225
      %p566 = pneg %p249
      %p567 = pneg %p246
      %p568 = pneg %p270
      %p569 = pneg %p267
      %p570 = pneg %p291
      %p571 = pneg %p288
      %p572 = pneg %p312
      %p573 = pneg %p309
      %p574 = pneg %p333
      %p575 = pneg %p330
      %p576 = pneg %p354
      %p577 = pneg %p351
      %p578 = pneg %p375
      %p579 = pneg %p372
      %p580 = pneg %p396
      %p581 = pneg %p393
      %p582 = pneg %p417
      %p583 = pneg %p414
      %p584 = pneg %p438
      %p585 = pneg %p435
      %s586 = smul.u32 16, %s29
      %p587 = scmp.lt.s32.totalorder %s586, 47
      %s588 = scalar_select %p587, %s586, 47
      %s589 = smul.addr %s588, 3
      %s590 = smul.addr %s589, 4
      %s591 = scalar_lea.vmem %s0, %s590
      %s592 = smul.u32 16, %s29
      %p593 = scmp.lt.s32.totalorder %s29, 2
      %s594 = scalar_select %p593, %s29, 2
      %s595 = scalar_lea.vmem %s1, %s594
      %s596 = smul.u32 16, %s29
      %p597 = scmp.lt.s32.totalorder %s596, 47
      %s598 = scalar_select %p597, %s596, 47
      %s599 = smul.addr %s598, 8
      %s600 = scalar_lea.vmem %s2, %s599
      %s601 = smul.u32 16, %s29
      %p603 = scmp.eq.s32.totalorder %s29, 0
      // Predicated region
      $region93: #{fully_connected_graph_forward.1} parent=91 // pred_check
        %p604 = pneg %p603
      $region94: #{fully_connected_graph_forward.1} parent=91 // pred_check_branch
        %606 = sbr.rel (%p604) target = $region96
      $region95: #{fully_connected_graph_forward.1} parent=91 // pred_region
        %v607 = vlaneseq
        %vm608 = vcmp.ge.s32.totalorder %v607, 0
        %vm609 = vcmp.lt.s32.totalorder %v607, 384
        %vm610 = vmand %vm608, %vm609
        %611 = vst.msk [vmem:[#allocation3] sm:$0x7] %vm610, 0.0
      $region96: #{fully_connected_graph_forward.1} parent=91 // pred_fallthru
        _
      %v612 = vld [vmem:[%s591] sm:$0xff]
      %v613 = vld [vmem:[%s591 + $0x8] sm:$0xf]
      %v614 = vld [vmem:[%s591 + $0xc] sm:$0xff]
      %v615 = vld [vmem:[%s591 + $0x14] sm:$0xf]
      %v616 = vld [vmem:[%s591 + $0x18] sm:$0xff]
      %v617 = vld [vmem:[%s591 + $0x20] sm:$0xf]
      %v618 = vld [vmem:[%s591 + $0x24] sm:$0xff]
      %v619 = vld [vmem:[%s591 + $0x2c] sm:$0xf]
      %v620 = vld [vmem:[%s591 + $0x30] sm:$0xff]
      %v621 = vld [vmem:[%s591 + $0x38] sm:$0xf]
      %v622 = vld [vmem:[%s591 + $0x3c] sm:$0xff]
      %v623 = vld [vmem:[%s591 + $0x44] sm:$0xf]
      %v624 = vld [vmem:[%s591 + $0x48] sm:$0xff]
      %v625 = vld [vmem:[%s591 + $0x50] sm:$0xf]
      %v626 = vld [vmem:[%s591 + $0x54] sm:$0xff]
      %v627 = vld [vmem:[%s591 + $0x5c] sm:$0xf]
      %v628 = vld [vmem:[%s591 + $0x60] sm:$0xff]
      %v629 = vld [vmem:[%s591 + $0x68] sm:$0xf]
      %v630 = vld [vmem:[%s591 + $0x6c] sm:$0xff]
      %v631 = vld [vmem:[%s591 + $0x74] sm:$0xf]
      %v632 = vld [vmem:[%s591 + $0x78] sm:$0xff]
      %v633 = vld [vmem:[%s591 + $0x80] sm:$0xf]
      %v634 = vld [vmem:[%s591 + $0x84] sm:$0xff]
      %v635 = vld [vmem:[%s591 + $0x8c] sm:$0xf]
      %v636 = vld [vmem:[%s591 + $0x90] sm:$0xff]
      %v637 = vld [vmem:[%s591 + $0x98] sm:$0xf]
      %v638 = vld [vmem:[%s591 + $0x9c] sm:$0xff]
      %v639 = vld [vmem:[%s591 + $0xa4] sm:$0xf]
      %v640 = vld [vmem:[%s591 + $0xa8] sm:$0xff]
      %v641 = vld [vmem:[%s591 + $0xb0] sm:$0xf]
      %v642 = vld [vmem:[%s591 + $0xb4] sm:$0xff]
      %v643 = vld [vmem:[%s591 + $0xbc] sm:$0xf]
      %v644 = vld [vmem:[%s600] sm:$0xff]
      %v645 = vld [vmem:[%s600 + $0x8] sm:$0xff]
      %v646 = vld [vmem:[%s600 + $0x10] sm:$0xff]
      %v647 = vld [vmem:[%s600 + $0x18] sm:$0xff]
      %v648 = vld [vmem:[%s600 + $0x20] sm:$0xff]
      %v649 = vld [vmem:[%s600 + $0x28] sm:$0xff]
      %v650 = vld [vmem:[%s600 + $0x30] sm:$0xff]
      %v651 = vld [vmem:[%s600 + $0x38] sm:$0xff]
      %v652 = vld [vmem:[%s600 + $0x40] sm:$0xff]
      %v653 = vld [vmem:[%s600 + $0x48] sm:$0xff]
      %v654 = vld [vmem:[%s600 + $0x50] sm:$0xff]
      %v655 = vld [vmem:[%s600 + $0x58] sm:$0xff]
      %v656 = vld [vmem:[%s600 + $0x60] sm:$0xff]
      %v657 = vld [vmem:[%s600 + $0x68] sm:$0xff]
      %v658 = vld [vmem:[%s600 + $0x70] sm:$0xff]
      %v659 = vld [vmem:[%s600 + $0x78] sm:$0xff]
      %v660 = vld [vmem:[%s4] sm:$0xf]
      %v661 = vld [vmem:[%s4 + $0x4] sm:$0xf]
      %v662 = vld [vmem:[%s4 + $0x8] sm:$0xf]
      %v663 = vld [vmem:[%s4 + $0xc] sm:$0xf]
      %v664 = vld [vmem:[%s4 + $0x10] sm:$0xf]
      %v665 = vld [vmem:[%s4 + $0x14] sm:$0xf]
      %v666 = vld [vmem:[%s4 + $0x18] sm:$0xf]
      %v667 = vld [vmem:[%s4 + $0x1c] sm:$0xf]
      %v668 = vld [vmem:[%s4 + $0x20] sm:$0xf]
      %v669 = vld [vmem:[%s4 + $0x24] sm:$0xf]
      %v670 = vld [vmem:[%s4 + $0x28] sm:$0xf]
      %v671 = vld [vmem:[%s4 + $0x2c] sm:$0xf]
      %v672 = vld [vmem:[%s4 + $0x30] sm:$0xf]
      %v673 = vld [vmem:[%s4 + $0x34] sm:$0xf]
      %v674 = vld [vmem:[%s4 + $0x38] sm:$0xf]
      %v675 = vld [vmem:[%s4 + $0x3c] sm:$0xf]
      %v676 = vld [vmem:[%s4 + $0x40] sm:$0xf]
      %v677 = vld [vmem:[%s4 + $0x44] sm:$0xf]
      %v678 = vld [vmem:[%s4 + $0x48] sm:$0xf]
      %v679 = vld [vmem:[%s4 + $0x4c] sm:$0xf]
      %v680 = vld [vmem:[%s4 + $0x50] sm:$0xf]
      %v681 = vld [vmem:[%s4 + $0x54] sm:$0xf]
      %v682 = vld [vmem:[%s4 + $0x58] sm:$0xf]
      %v683 = vld [vmem:[%s4 + $0x5c] sm:$0xf]
      %v684 = vld [vmem:[%s4 + $0x60] sm:$0xf]
      %v685 = vld [vmem:[%s4 + $0x64] sm:$0xf]
      %v686 = vld [vmem:[%s4 + $0x68] sm:$0xf]
      %v687 = vld [vmem:[%s4 + $0x6c] sm:$0xf]
      %v688 = vld [vmem:[%s4 + $0x70] sm:$0xf]
      %v689 = vld [vmem:[%s4 + $0x74] sm:$0xf]
      %v690 = vld [vmem:[%s4 + $0x78] sm:$0xf]
      %v691 = vld [vmem:[%s4 + $0x7c] sm:$0xf]
      %v692 = vld [vmem:[%s4 + $0x80] sm:$0xf]
      %v693 = vld [vmem:[%s4 + $0x84] sm:$0xf]
      %v694 = vld [vmem:[%s4 + $0x88] sm:$0xf]
      %v695 = vld [vmem:[%s4 + $0x8c] sm:$0xf]
      %v696 = vld [vmem:[%s4 + $0x90] sm:$0xf]
      %v697 = vld [vmem:[%s4 + $0x94] sm:$0xf]
      %v698 = vld [vmem:[%s4 + $0x98] sm:$0xf]
      %v699 = vld [vmem:[%s4 + $0x9c] sm:$0xf]
      %v700 = vld [vmem:[%s4 + $0xa0] sm:$0xf]
      %v701 = vld [vmem:[%s4 + $0xa4] sm:$0xf]
      %v702 = vld [vmem:[%s4 + $0xa8] sm:$0xf]
      %v703 = vld [vmem:[%s4 + $0xac] sm:$0xf]
      %v704 = vld [vmem:[%s4 + $0xb0] sm:$0xf]
      %v705 = vld [vmem:[%s4 + $0xb4] sm:$0xf]
      %v706 = vld [vmem:[%s4 + $0xb8] sm:$0xf]
      %v707 = vld [vmem:[%s4 + $0xbc] sm:$0xf]
      %v740 = vunpack.c.l.b16 %v612
      %v741 = vunpack.c.h.b16 %v612
      %v742 = vunpack.c.l.b16 %v613
      %v743 = vunpack.c.l.b16 %v614
      %v744 = vunpack.c.h.b16 %v614
      %v745 = vunpack.c.l.b16 %v615
      %v746 = vunpack.c.l.b16 %v616
      %v747 = vunpack.c.h.b16 %v616
      %v748 = vunpack.c.l.b16 %v617
      %v749 = vunpack.c.l.b16 %v618
      %v750 = vunpack.c.h.b16 %v618
      %v751 = vunpack.c.l.b16 %v619
      %v752 = vunpack.c.l.b16 %v620
      %v753 = vunpack.c.h.b16 %v620
      %v754 = vunpack.c.l.b16 %v621
      %v755 = vunpack.c.l.b16 %v622
      %v756 = vunpack.c.h.b16 %v622
      %v757 = vunpack.c.l.b16 %v623
      %v758 = vunpack.c.l.b16 %v624
      %v759 = vunpack.c.h.b16 %v624
      %v760 = vunpack.c.l.b16 %v625
      %v761 = vunpack.c.l.b16 %v626
      %v762 = vunpack.c.h.b16 %v626
      %v763 = vunpack.c.l.b16 %v627
      %v764 = vunpack.c.l.b16 %v628
      %v765 = vunpack.c.h.b16 %v628
      %v766 = vunpack.c.l.b16 %v629
      %v767 = vunpack.c.l.b16 %v630
      %v768 = vunpack.c.h.b16 %v630
      %v769 = vunpack.c.l.b16 %v631
      %v770 = vunpack.c.l.b16 %v632
      %v771 = vunpack.c.h.b16 %v632
      %v772 = vunpack.c.l.b16 %v633
      %v773 = vunpack.c.l.b16 %v634
      %v774 = vunpack.c.h.b16 %v634
      %v775 = vunpack.c.l.b16 %v635
      %v776 = vunpack.c.l.b16 %v636
      %v777 = vunpack.c.h.b16 %v636
      %v778 = vunpack.c.l.b16 %v637
      %v779 = vunpack.c.l.b16 %v638
      %v780 = vunpack.c.h.b16 %v638
      %v781 = vunpack.c.l.b16 %v639
      %v782 = vunpack.c.l.b16 %v640
      %v783 = vunpack.c.h.b16 %v640
      %v784 = vunpack.c.l.b16 %v641
      %v785 = vunpack.c.l.b16 %v642
      %v786 = vunpack.c.h.b16 %v642
      %v787 = vunpack.c.l.b16 %v643
      %v788 = vpack.c.b16 %v743, %v740
      %v789 = vpack.c.b16 %v744, %v741
      %v790 = vpack.c.b16 %v745, %v742
      %v791 = vpack.c.b16 %v749, %v746
      %v792 = vpack.c.b16 %v750, %v747
      %v793 = vpack.c.b16 %v751, %v748
      %v794 = vpack.c.b16 %v755, %v752
      %v795 = vpack.c.b16 %v756, %v753
      %v796 = vpack.c.b16 %v757, %v754
      %v797 = vpack.c.b16 %v761, %v758
      %v798 = vpack.c.b16 %v762, %v759
      %v799 = vpack.c.b16 %v763, %v760
      %v800 = vpack.c.b16 %v767, %v764
      %v801 = vpack.c.b16 %v768, %v765
      %v802 = vpack.c.b16 %v769, %v766
      %v803 = vpack.c.b16 %v773, %v770
      %v804 = vpack.c.b16 %v774, %v771
      %v805 = vpack.c.b16 %v775, %v772
      %v806 = vpack.c.b16 %v779, %v776
      %v807 = vpack.c.b16 %v780, %v777
      %v808 = vpack.c.b16 %v781, %v778
      %v809 = vpack.c.b16 %v785, %v782
      %v810 = vpack.c.b16 %v786, %v783
      %v811 = vpack.c.b16 %v787, %v784
      %v884 = vunpack.c.l.b16 %v660
      %v885 = vunpack.c.l.b16 %v661
      %v886 = vunpack.c.l.b16 %v662
      %v887 = vunpack.c.l.b16 %v663
      %v888 = vunpack.c.l.b16 %v664
      %v889 = vunpack.c.l.b16 %v665
      %v890 = vunpack.c.l.b16 %v666
      %v891 = vunpack.c.l.b16 %v667
      %v892 = vunpack.c.l.b16 %v668
      %v893 = vunpack.c.l.b16 %v669
      %v894 = vunpack.c.l.b16 %v670
      %v895 = vunpack.c.l.b16 %v671
      %v896 = vunpack.c.l.b16 %v672
      %v897 = vunpack.c.l.b16 %v673
      %v898 = vunpack.c.l.b16 %v674
      %v899 = vunpack.c.l.b16 %v675
      %v900 = vunpack.c.l.b16 %v676
      %v901 = vunpack.c.l.b16 %v677
      %v902 = vunpack.c.l.b16 %v678
      %v903 = vunpack.c.l.b16 %v679
      %v904 = vunpack.c.l.b16 %v680
      %v905 = vunpack.c.l.b16 %v681
      %v906 = vunpack.c.l.b16 %v682
      %v907 = vunpack.c.l.b16 %v683
      %v908 = vunpack.c.l.b16 %v684
      %v909 = vunpack.c.l.b16 %v685
      %v910 = vunpack.c.l.b16 %v686
      %v911 = vunpack.c.l.b16 %v687
      %v912 = vunpack.c.l.b16 %v688
      %v913 = vunpack.c.l.b16 %v689
      %v914 = vunpack.c.l.b16 %v690
      %v915 = vunpack.c.l.b16 %v691
      %v916 = vunpack.c.l.b16 %v692
      %v917 = vunpack.c.l.b16 %v693
      %v918 = vunpack.c.l.b16 %v694
      %v919 = vunpack.c.l.b16 %v695
      %v920 = vunpack.c.l.b16 %v696
      %v921 = vunpack.c.l.b16 %v697
      %v922 = vunpack.c.l.b16 %v698
      %v923 = vunpack.c.l.b16 %v699
      %v924 = vunpack.c.l.b16 %v700
      %v925 = vunpack.c.l.b16 %v701
      %v926 = vunpack.c.l.b16 %v702
      %v927 = vunpack.c.l.b16 %v703
      %v928 = vunpack.c.l.b16 %v704
      %v929 = vunpack.c.l.b16 %v705
      %v930 = vunpack.c.l.b16 %v706
      %v931 = vunpack.c.l.b16 %v707
      %v932 = vpack.c.b16 %v885, %v884
      %v933 = vpack.c.b16 %v887, %v886
      %v934 = vpack.c.b16 %v889, %v888
      %v935 = vpack.c.b16 %v891, %v890
      %v936 = vpack.c.b16 %v893, %v892
      %v937 = vpack.c.b16 %v895, %v894
      %v938 = vpack.c.b16 %v897, %v896
      %v939 = vpack.c.b16 %v899, %v898
      %v940 = vpack.c.b16 %v901, %v900
      %v941 = vpack.c.b16 %v903, %v902
      %v942 = vpack.c.b16 %v905, %v904
      %v943 = vpack.c.b16 %v907, %v906
      %v944 = vpack.c.b16 %v909, %v908
      %v945 = vpack.c.b16 %v911, %v910
      %v946 = vpack.c.b16 %v913, %v912
      %v947 = vpack.c.b16 %v915, %v914
      %v948 = vpack.c.b16 %v917, %v916
      %v949 = vpack.c.b16 %v919, %v918
      %v950 = vpack.c.b16 %v921, %v920
      %v951 = vpack.c.b16 %v923, %v922
      %v952 = vpack.c.b16 %v925, %v924
      %v953 = vpack.c.b16 %v927, %v926
      %v954 = vpack.c.b16 %v929, %v928
      %v955 = vpack.c.b16 %v931, %v930
      %980 = vmatprep.subr.bf16.mxu0 0
      %981 = vmatpush1.bf16.msra.mxu0 %v932
      %982 = vmatprep.subr.bf16.mxu0 0
      %983 = vmatpush1.bf16.msra.mxu0 %v933
      %984 = vmatprep.subr.bf16.mxu0 0
      %985 = vmatpush1.bf16.msra.mxu0 %v934
      %986 = vmatprep.subr.bf16.mxu0 0
      %987 = vmatpush1.bf16.msra.mxu0 %v935
      %988 = vmatprep.subr.bf16.mxu0 0
      %989 = vmatpush1.bf16.msra.mxu0 %v936
      %990 = vmatprep.subr.bf16.mxu0 0
      %991 = vmatpush1.bf16.msra.mxu0 %v937
      %992 = vmatprep.subr.bf16.mxu0 0
      %993 = vmatpush1.bf16.msra.mxu0 %v938
      %994 = vmatprep.subr.bf16.mxu0 0
      %995 = vmatpush1.bf16.msra.mxu0 %v939
      %996 = vmatprep.subr.bf16.mxu0 0
      %997 = vmatpush1.bf16.msra.mxu0 %v940
      %998 = vmatprep.subr.bf16.mxu0 0
      %999 = vmatpush1.bf16.msra.mxu0 %v941
      %1000 = vmatprep.subr.bf16.mxu0 0
      %1001 = vmatpush1.bf16.msra.mxu0 %v942
      %1002 = vmatprep.subr.bf16.mxu0 0
      %1003 = vmatpush1.bf16.msra.mxu0 %v943
      %1004 = vmatprep.subr.bf16.mxu0 0
      %1005 = vmatpush1.bf16.msra.mxu0 %v944
      %1006 = vmatprep.subr.bf16.mxu0 0
      %1007 = vmatpush1.bf16.msra.mxu0 %v945
      %1008 = vmatprep.subr.bf16.mxu0 0
      %1009 = vmatpush1.bf16.msra.mxu0 %v946
      %1010 = vmatprep.subr.bf16.mxu0 0
      %1011 = vmatpush1.bf16.msra.mxu0 %v947
      %1012 = vmatprep.mubr.bf16.mxu0 %v789
      %1013 = vmatmul.mubr.bf16.gmra.mrb[0].mxu0 %v788
      %v1014 = vpop.f32.mrb[0].mxu0
      %v1015 = vadd.f32 0.0, %v1014
      %v1016 = vpop.f32.mrb[0].mxu0
      %v1017 = vpop.f32.mrb[0].mxu0
      %v1018 = vadd.f32 0.0, %v1017
      %v1019 = vpop.f32.mrb[0].mxu0
      %1020 = vmatprep.mubr.bf16.mxu0 %v792
      %1021 = vmatmul.mubr.bf16.gmra.mrb[0].mxu0 %v791
      %v1022 = vpop.f32.mrb[0].mxu0
      %v1023 = vadd.f32 0.0, %v1022
      %v1024 = vpop.f32.mrb[0].mxu0
      %v1025 = vpop.f32.mrb[0].mxu0
      %v1026 = vadd.f32 0.0, %v1025
      %v1027 = vpop.f32.mrb[0].mxu0
      %1028 = vmatprep.mubr.bf16.mxu0 %v795
      %1029 = vmatmul.mubr.bf16.gmra.mrb[0].mxu0 %v794
      %v1030 = vpop.f32.mrb[0].mxu0
      %v1031 = vadd.f32 0.0, %v1030
      %v1032 = vpop.f32.mrb[0].mxu0
      %v1033 = vpop.f32.mrb[0].mxu0
      %v1034 = vadd.f32 0.0, %v1033
      %v1035 = vpop.f32.mrb[0].mxu0
      %1036 = vmatprep.mubr.bf16.mxu0 %v798
      %1037 = vmatmul.mubr.bf16.gmra.mrb[0].mxu0 %v797
      %v1038 = vpop.f32.mrb[0].mxu0
      %v1039 = vadd.f32 0.0, %v1038
      %v1040 = vpop.f32.mrb[0].mxu0
      %v1041 = vpop.f32.mrb[0].mxu0
      %v1042 = vadd.f32 0.0, %v1041
      %v1043 = vpop.f32.mrb[0].mxu0
      %1044 = vmatprep.mubr.bf16.mxu0 %v801
      %1045 = vmatmul.mubr.bf16.gmra.mrb[0].mxu0 %v800
      %v1046 = vpop.f32.mrb[0].mxu0
      %v1047 = vadd.f32 0.0, %v1046
      %v1048 = vpop.f32.mrb[0].mxu0
      %v1049 = vpop.f32.mrb[0].mxu0
      %v1050 = vadd.f32 0.0, %v1049
      %v1051 = vpop.f32.mrb[0].mxu0
      %1052 = vmatprep.mubr.bf16.mxu0 %v804
      %1053 = vmatmul.mubr.bf16.gmra.mrb[0].mxu0 %v803
      %v1054 = vpop.f32.mrb[0].mxu0
      %v1055 = vadd.f32 0.0, %v1054
      %v1056 = vpop.f32.mrb[0].mxu0
      %v1057 = vpop.f32.mrb[0].mxu0
      %v1058 = vadd.f32 0.0, %v1057
      %v1059 = vpop.f32.mrb[0].mxu0
      %1060 = vmatprep.mubr.bf16.mxu0 %v807
      %1061 = vmatmul.mubr.bf16.gmra.mrb[0].mxu0 %v806
      %v1062 = vpop.f32.mrb[0].mxu0
      %v1063 = vadd.f32 0.0, %v1062
      %v1064 = vpop.f32.mrb[0].mxu0
      %v1065 = vpop.f32.mrb[0].mxu0
      %v1066 = vadd.f32 0.0, %v1065
      %v1067 = vpop.f32.mrb[0].mxu0
      %1068 = vmatprep.mubr.bf16.mxu0 %v810
      %1069 = vmatmul.mubr.bf16.gmra.mrb[0].mxu0 %v809
      %v1070 = vpop.f32.mrb[0].mxu0
      %v1071 = vadd.f32 0.0, %v1070
      %v1072 = vpop.f32.mrb[0].mxu0
      %v1073 = vpop.f32.mrb[0].mxu0
      %v1074 = vadd.f32 0.0, %v1073
      %v1075 = vpop.f32.mrb[0].mxu0
      %1076 = vdwg.mxu0
      %1077 = vmatprep.subr.bf16.mxu0 0
      %1078 = vmatpush1.bf16.msra.mxu0 %v948
      %1079 = vmatprep.subr.bf16.mxu0 0
      %1080 = vmatpush1.bf16.msra.mxu0 %v949
      %1081 = vmatprep.subr.bf16.mxu0 0
      %1082 = vmatpush1.bf16.msra.mxu0 %v950
      %1083 = vmatprep.subr.bf16.mxu0 0
      %1084 = vmatpush1.bf16.msra.mxu0 %v951
      %1085 = vmatprep.subr.bf16.mxu0 0
      %1086 = vmatpush1.bf16.msra.mxu0 %v952
      %1087 = vmatprep.subr.bf16.mxu0 0
      %1088 = vmatpush1.bf16.msra.mxu0 %v953
      %1089 = vmatprep.subr.bf16.mxu0 0
      %1090 = vmatpush1.bf16.msra.mxu0 %v954
      %1091 = vmatprep.subr.bf16.mxu0 0
      %1092 = vmatpush1.bf16.msra.mxu0 %v955
      %1093 = vmatprep.subr.bf16.mxu0 0
      %1094 = vmatpush1.bf16.msra.mxu0 0
      %1095 = vmatprep.subr.bf16.mxu0 0
      %1096 = vmatpush1.bf16.msra.mxu0 0
      %1097 = vmatprep.subr.bf16.mxu0 0
      %1098 = vmatpush1.bf16.msra.mxu0 0
      %1099 = vmatprep.subr.bf16.mxu0 0
      %1100 = vmatpush1.bf16.msra.mxu0 0
      %1101 = vmatprep.subr.bf16.mxu0 0
      %1102 = vmatpush1.bf16.msra.mxu0 0
      %1103 = vmatprep.subr.bf16.mxu0 0
      %1104 = vmatpush1.bf16.msra.mxu0 0
      %1105 = vmatprep.subr.bf16.mxu0 0
      %1106 = vmatpush1.bf16.msra.mxu0 0
      %1107 = vmatprep.subr.bf16.mxu0 0
      %1108 = vmatpush1.bf16.msra.mxu0 0
      %1109 = vmatprep.mubr.bf16.mxu0 0
      %1110 = vmatmul.mubr.bf16.gmra.mrb[0].mxu0 %v790
      %v1111 = vpop.f32.mrb[0].mxu0
      %v1112 = vadd.f32 %v1015, %v1111
      %v1113 = vpop.f32.mrb[0].mxu0
      %v1114 = vpop.f32.mrb[0].mxu0
      %v1115 = vadd.f32 %v1018, %v1114
      %v1116 = vpop.f32.mrb[0].mxu0
      %1117 = vmatprep.mubr.bf16.mxu0 0
      %1118 = vmatmul.mubr.bf16.gmra.mrb[0].mxu0 %v793
      %v1119 = vpop.f32.mrb[0].mxu0
      %v1120 = vadd.f32 %v1023, %v1119
      %v1121 = vpop.f32.mrb[0].mxu0
      %v1122 = vpop.f32.mrb[0].mxu0
      %v1123 = vadd.f32 %v1026, %v1122
      %v1124 = vpop.f32.mrb[0].mxu0
      %1125 = vmatprep.mubr.bf16.mxu0 0
      %1126 = vmatmul.mubr.bf16.gmra.mrb[0].mxu0 %v796
      %v1127 = vpop.f32.mrb[0].mxu0
      %v1128 = vadd.f32 %v1031, %v1127
      %v1129 = vpop.f32.mrb[0].mxu0
      %v1130 = vpop.f32.mrb[0].mxu0
      %v1131 = vadd.f32 %v1034, %v1130
      %v1132 = vpop.f32.mrb[0].mxu0
      %1133 = vmatprep.mubr.bf16.mxu0 0
      %1134 = vmatmul.mubr.bf16.gmra.mrb[0].mxu0 %v799
      %v1135 = vpop.f32.mrb[0].mxu0
      %v1136 = vadd.f32 %v1039, %v1135
      %v1137 = vpop.f32.mrb[0].mxu0
      %v1138 = vpop.f32.mrb[0].mxu0
      %v1139 = vadd.f32 %v1042, %v1138
      %v1140 = vpop.f32.mrb[0].mxu0
      %1141 = vmatprep.mubr.bf16.mxu0 0
      %1142 = vmatmul.mubr.bf16.gmra.mrb[0].mxu0 %v802
      %v1143 = vpop.f32.mrb[0].mxu0
      %v1144 = vadd.f32 %v1047, %v1143
      %v1145 = vpop.f32.mrb[0].mxu0
      %v1146 = vpop.f32.mrb[0].mxu0
      %v1147 = vadd.f32 %v1050, %v1146
      %v1148 = vpop.f32.mrb[0].mxu0
      %1149 = vmatprep.mubr.bf16.mxu0 0
      %1150 = vmatmul.mubr.bf16.gmra.mrb[0].mxu0 %v805
      %v1151 = vpop.f32.mrb[0].mxu0
      %v1152 = vadd.f32 %v1055, %v1151
      %v1153 = vpop.f32.mrb[0].mxu0
      %v1154 = vpop.f32.mrb[0].mxu0
      %v1155 = vadd.f32 %v1058, %v1154
      %v1156 = vpop.f32.mrb[0].mxu0
      %1157 = vmatprep.mubr.bf16.mxu0 0
      %1158 = vmatmul.mubr.bf16.gmra.mrb[0].mxu0 %v808
      %v1159 = vpop.f32.mrb[0].mxu0
      %v1160 = vadd.f32 %v1063, %v1159
      %v1161 = vpop.f32.mrb[0].mxu0
      %v1162 = vpop.f32.mrb[0].mxu0
      %v1163 = vadd.f32 %v1066, %v1162
      %v1164 = vpop.f32.mrb[0].mxu0
      %1165 = vmatprep.mubr.bf16.mxu0 0
      %1166 = vmatmul.mubr.bf16.gmra.mrb[0].mxu0 %v811
      %v1167 = vpop.f32.mrb[0].mxu0
      %v1168 = vadd.f32 %v1071, %v1167
      %v1169 = vpop.f32.mrb[0].mxu0
      %v1170 = vpop.f32.mrb[0].mxu0
      %v1171 = vadd.f32 %v1074, %v1170
      %v1172 = vpop.f32.mrb[0].mxu0
      %1173 = vdwg.mxu0
      %1175 = vset.pattern.permute.xlu0 0
      %1176 = vperm.xlu0 %1175, %v644
      %v1177 = vpop.permute.xlu0 %1176
      %1180 = vset.pattern.permute.xlu0 0
      %1181 = vperm.xlu0 %1180, %v645
      %v1182 = vpop.permute.xlu0 %1181
      %1185 = vset.pattern.permute.xlu0 0
      %1186 = vperm.xlu0 %1185, %v646
      %v1187 = vpop.permute.xlu0 %1186
      %1190 = vset.pattern.permute.xlu0 0
      %1191 = vperm.xlu0 %1190, %v647
      %v1192 = vpop.permute.xlu0 %1191
      %1195 = vset.pattern.permute.xlu0 0
      %1196 = vperm.xlu0 %1195, %v648
      %v1197 = vpop.permute.xlu0 %1196
      %1200 = vset.pattern.permute.xlu0 0
      %1201 = vperm.xlu0 %1200, %v649
      %v1202 = vpop.permute.xlu0 %1201
      %1205 = vset.pattern.permute.xlu0 0
      %1206 = vperm.xlu0 %1205, %v650
      %v1207 = vpop.permute.xlu0 %1206
      %1210 = vset.pattern.permute.xlu0 0
      %1211 = vperm.xlu0 %1210, %v651
      %v1212 = vpop.permute.xlu0 %1211
      %1215 = vset.pattern.permute.xlu0 0
      %1216 = vperm.xlu0 %1215, %v652
      %v1217 = vpop.permute.xlu0 %1216
      %1220 = vset.pattern.permute.xlu0 0
      %1221 = vperm.xlu0 %1220, %v653
      %v1222 = vpop.permute.xlu0 %1221
      %1225 = vset.pattern.permute.xlu0 0
      %1226 = vperm.xlu0 %1225, %v654
      %v1227 = vpop.permute.xlu0 %1226
      %1230 = vset.pattern.permute.xlu0 0
      %1231 = vperm.xlu0 %1230, %v655
      %v1232 = vpop.permute.xlu0 %1231
      %1235 = vset.pattern.permute.xlu0 0
      %1236 = vperm.xlu0 %1235, %v656
      %v1237 = vpop.permute.xlu0 %1236
      %1240 = vset.pattern.permute.xlu0 0
      %1241 = vperm.xlu0 %1240, %v657
      %v1242 = vpop.permute.xlu0 %1241
      %1245 = vset.pattern.permute.xlu0 0
      %1246 = vperm.xlu0 %1245, %v658
      %v1247 = vpop.permute.xlu0 %1246
      %1250 = vset.pattern.permute.xlu0 0
      %1251 = vperm.xlu0 %1250, %v659
      %v1252 = vpop.permute.xlu0 %1251
      %v1254 = vmul.f32 %v1177, %v1112
      %v1255 = vmul.f32 %v1182, %v1115
      %v1256 = vmul.f32 %v1187, %v1120
      %v1257 = vmul.f32 %v1192, %v1123
      %v1258 = vmul.f32 %v1197, %v1128
      %v1259 = vmul.f32 %v1202, %v1131
      %v1260 = vmul.f32 %v1207, %v1136
      %v1261 = vmul.f32 %v1212, %v1139
      %v1262 = vmul.f32 %v1217, %v1144
      %v1263 = vmul.f32 %v1222, %v1147
      %v1264 = vmul.f32 %v1227, %v1152
      %v1265 = vmul.f32 %v1232, %v1155
      %v1266 = vmul.f32 %v1237, %v1160
      %v1267 = vmul.f32 %v1242, %v1163
      %v1268 = vmul.f32 %v1247, %v1168
      %v1269 = vmul.f32 %v1252, %v1171
      %s1270 = smul.u32 %s29, 128
      %s1271 = scalar_lea.vmem [#allocation2], %s1270
      %1272 = vst [vmem:[%s1271] sm:$0xff] %v1254
      %1273 = vst [vmem:[%s1271 + $0x8] sm:$0xff] %v1255
      %1274 = vst [vmem:[%s1271 + $0x10] sm:$0xff] %v1256
      %1275 = vst [vmem:[%s1271 + $0x18] sm:$0xff] %v1257
      %1276 = vst [vmem:[%s1271 + $0x20] sm:$0xff] %v1258
      %1277 = vst [vmem:[%s1271 + $0x28] sm:$0xff] %v1259
      %1278 = vst [vmem:[%s1271 + $0x30] sm:$0xff] %v1260
      %1279 = vst [vmem:[%s1271 + $0x38] sm:$0xff] %v1261
      %1280 = vst [vmem:[%s1271 + $0x40] sm:$0xff] %v1262
      %1281 = vst [vmem:[%s1271 + $0x48] sm:$0xff] %v1263
      %1282 = vst [vmem:[%s1271 + $0x50] sm:$0xff] %v1264
      %1283 = vst [vmem:[%s1271 + $0x58] sm:$0xff] %v1265
      %1284 = vst [vmem:[%s1271 + $0x60] sm:$0xff] %v1266
      %1285 = vst [vmem:[%s1271 + $0x68] sm:$0xff] %v1267
      %1286 = vst [vmem:[%s1271 + $0x70] sm:$0xff] %v1268
      %1287 = vst [vmem:[%s1271 + $0x78] sm:$0xff] %v1269
      %v1288 = vld [vmem:[%s595] sm:$0x1]
      %v1289 = vpack.c.bf16 %v1288, %v1288
      %v1290 = vld [vmem:[#allocation3] sm:$0x7]
      %1291 = vmatprep.subr.bf16.mxu0 %v789
      %1292 = vmatpush1.bf16.msra.mxu0 %v788
      %1293 = vmatprep.subr.bf16.mxu0 %v792
      %1294 = vmatpush1.bf16.msra.mxu0 %v791
      %1295 = vmatprep.subr.bf16.mxu0 %v795
      %1296 = vmatpush1.bf16.msra.mxu0 %v794
      %1297 = vmatprep.subr.bf16.mxu0 %v798
      %1298 = vmatpush1.bf16.msra.mxu0 %v797
      %1299 = vmatprep.subr.bf16.mxu0 %v801
      %1300 = vmatpush1.bf16.msra.mxu0 %v800
      %1301 = vmatprep.subr.bf16.mxu0 %v804
      %1302 = vmatpush1.bf16.msra.mxu0 %v803
      %1303 = vmatprep.subr.bf16.mxu0 %v807
      %1304 = vmatpush1.bf16.msra.mxu0 %v806
      %1305 = vmatprep.subr.bf16.mxu0 %v810
      %1306 = vmatpush1.bf16.msra.mxu0 %v809
      %1307 = vmatprep.subr.bf16.mxu0 0
      %1308 = vmatpush1.bf16.msra.mxu0 0
      %1309 = vmatprep.subr.bf16.mxu0 0
      %1310 = vmatpush1.bf16.msra.mxu0 0
      %1311 = vmatprep.subr.bf16.mxu0 0
      %1312 = vmatpush1.bf16.msra.mxu0 0
      %1313 = vmatprep.subr.bf16.mxu0 0
      %1314 = vmatpush1.bf16.msra.mxu0 0
      %1315 = vmatprep.subr.bf16.mxu0 0
      %1316 = vmatpush1.bf16.msra.mxu0 0
      %1317 = vmatprep.subr.bf16.mxu0 0
      %1318 = vmatpush1.bf16.msra.mxu0 0
      %1319 = vmatprep.subr.bf16.mxu0 0
      %1320 = vmatpush1.bf16.msra.mxu0 0
      %1321 = vmatprep.subr.bf16.mxu0 0
      %1322 = vmatpush1.bf16.msra.mxu0 0
      %1323 = vmatprep.mubr.bf16.mxu0 0
      %1324 = vmatmul.mubr.bf16.gmra.mrb[0].mxu0 %v1289
      %v1325 = vpop.f32.mrb[0].mxu0
      %v1326 = vadd.f32 0.0, %v1325
      %v1327 = vpop.f32.mrb[0].mxu0
      %v1328 = vadd.f32 0.0, %v1327
      %v1329 = vpop.f32.mrb[0].mxu0
      %v1330 = vpop.f32.mrb[0].mxu0
      %1331 = vdwg.mxu0
      %1332 = vmatprep.subr.bf16.mxu0 0
      %1333 = vmatpush1.bf16.msra.mxu0 %v790
      %1334 = vmatprep.subr.bf16.mxu0 0
      %1335 = vmatpush1.bf16.msra.mxu0 %v793
      %1336 = vmatprep.subr.bf16.mxu0 0
      %1337 = vmatpush1.bf16.msra.mxu0 %v796
      %1338 = vmatprep.subr.bf16.mxu0 0
      %1339 = vmatpush1.bf16.msra.mxu0 %v799
      %1340 = vmatprep.subr.bf16.mxu0 0
      %1341 = vmatpush1.bf16.msra.mxu0 %v802
      %1342 = vmatprep.subr.bf16.mxu0 0
      %1343 = vmatpush1.bf16.msra.mxu0 %v805
      %1344 = vmatprep.subr.bf16.mxu0 0
      %1345 = vmatpush1.bf16.msra.mxu0 %v808
      %1346 = vmatprep.subr.bf16.mxu0 0
      %1347 = vmatpush1.bf16.msra.mxu0 %v811
      %1348 = vmatprep.subr.bf16.mxu0 0
      %1349 = vmatpush1.bf16.msra.mxu0 0
      %1350 = vmatprep.subr.bf16.mxu0 0
      %1351 = vmatpush1.bf16.msra.mxu0 0
      %1352 = vmatprep.subr.bf16.mxu0 0
      %1353 = vmatpush1.bf16.msra.mxu0 0
      %1354 = vmatprep.subr.bf16.mxu0 0
      %1355 = vmatpush1.bf16.msra.mxu0 0
      %1356 = vmatprep.subr.bf16.mxu0 0
      %1357 = vmatpush1.bf16.msra.mxu0 0
      %1358 = vmatprep.subr.bf16.mxu0 0
      %1359 = vmatpush1.bf16.msra.mxu0 0
      %1360 = vmatprep.subr.bf16.mxu0 0
      %1361 = vmatpush1.bf16.msra.mxu0 0
      %1362 = vmatprep.subr.bf16.mxu0 0
      %1363 = vmatpush1.bf16.msra.mxu0 0
      %1364 = vmatprep.mubr.bf16.mxu0 0
      %1365 = vmatmul.mubr.bf16.gmra.mrb[0].mxu0 %v1289
      %v1366 = vpop.f32.mrb[0].mxu0
      %v1367 = vadd.f32 0.0, %v1366
      %v1368 = vpop.f32.mrb[0].mxu0
      %v1369 = vpop.f32.mrb[0].mxu0
      %v1370 = vpop.f32.mrb[0].mxu0
      %1371 = vdwg.mxu0
      %v1375 = vcombine.low %v1326, %v1328
      %v1377 = vunpack.c.l.s4 1966171168
      %v1378 = vunpack.c.0.s8 %v1377
      %v1379 = vlaneseq
      %v1380 = vshrl.u32 %v1379, 7
      %v1381 = vsub.s32 %v1378, %v1380
      %v1382 = vrot.slane %v1375, %v1381
      %v1384 = vunpack.c.l.s4 1966171168
      %v1385 = vunpack.c.0.s8 %v1384
      %v1386 = vlaneseq
      %v1387 = vshrl.u32 %v1386, 7
      %v1388 = vsub.s32 %v1385, %v1387
      %v1389 = vrot.slane %v1367, %v1388
      %v1390 = vcombine.low %v1382, %v1389
      %v1392 = vunpack.c.l.s4 1966171168
      %v1393 = vunpack.c.0.s8 %v1392
      %v1394 = vlaneseq
      %v1395 = vshrl.u32 %v1394, 7
      %v1396 = vsub.s32 %v1393, %v1395
      %v1397 = vrot.slane %v1390, %v1396
      %v1399 = vadd.f32 %v1290, %v1397
      %v1400 = vlaneseq
      %vm1401 = vcmp.ge.s32.totalorder %v1400, 0
      %vm1402 = vcmp.lt.s32.totalorder %v1400, 384
      %vm1403 = vmand %vm1401, %vm1402
      %1404 = vst.msk [vmem:[#allocation3] sm:$0x7] %vm1403, %v1399
      %p1405 = scmp.eq.s32.totalorder %s29, 2
      // Predicated region
      $region97: #{fully_connected_graph_forward.1} parent=91 // pred_check
        %p1406 = pneg %p1405
      $region98: #{fully_connected_graph_forward.1} parent=91 // pred_check_branch
        %1408 = sbr.rel (%p1406) target = $region100
      $region99: #{fully_connected_graph_forward.1} parent=91 // pred_region
        %v1409 = vld [vmem:[#allocation2] sm:$0xff]
        %v1410 = vld [vmem:[#allocation2 + $0x8] sm:$0xff]
        %v1411 = vld [vmem:[#allocation2 + $0x10] sm:$0xff]
        %v1412 = vld [vmem:[#allocation2 + $0x18] sm:$0xff]
        %v1413 = vld [vmem:[#allocation2 + $0x20] sm:$0xff]
        %v1414 = vld [vmem:[#allocation2 + $0x28] sm:$0xff]
        %v1415 = vld [vmem:[#allocation2 + $0x30] sm:$0xff]
        %v1416 = vld [vmem:[#allocation2 + $0x38] sm:$0xff]
        %v1417 = vld [vmem:[#allocation2 + $0x40] sm:$0xff]
        %v1418 = vld [vmem:[#allocation2 + $0x48] sm:$0xff]
        %v1419 = vld [vmem:[#allocation2 + $0x50] sm:$0xff]
        %v1420 = vld [vmem:[#allocation2 + $0x58] sm:$0xff]
        %v1421 = vld [vmem:[#allocation2 + $0x60] sm:$0xff]
        %v1422 = vld [vmem:[#allocation2 + $0x68] sm:$0xff]
        %v1423 = vld [vmem:[#allocation2 + $0x70] sm:$0xff]
        %v1424 = vld [vmem:[#allocation2 + $0x78] sm:$0xff]
        %v1425 = vld [vmem:[#allocation2 + $0x80] sm:$0xff]
        %v1426 = vld [vmem:[#allocation2 + $0x88] sm:$0xff]
        %v1427 = vld [vmem:[#allocation2 + $0x90] sm:$0xff]
        %v1428 = vld [vmem:[#allocation2 + $0x98] sm:$0xff]
        %v1429 = vld [vmem:[#allocation2 + $0xa0] sm:$0xff]
        %v1430 = vld [vmem:[#allocation2 + $0xa8] sm:$0xff]
        %v1431 = vld [vmem:[#allocation2 + $0xb0] sm:$0xff]
        %v1432 = vld [vmem:[#allocation2 + $0xb8] sm:$0xff]
        %v1433 = vld [vmem:[#allocation2 + $0xc0] sm:$0xff]
        %v1434 = vld [vmem:[#allocation2 + $0xc8] sm:$0xff]
        %v1435 = vld [vmem:[#allocation2 + $0xd0] sm:$0xff]
        %v1436 = vld [vmem:[#allocation2 + $0xd8] sm:$0xff]
        %v1437 = vld [vmem:[#allocation2 + $0xe0] sm:$0xff]
        %v1438 = vld [vmem:[#allocation2 + $0xe8] sm:$0xff]
        %v1439 = vld [vmem:[#allocation2 + $0xf0] sm:$0xff]
        %v1440 = vld [vmem:[#allocation2 + $0xf8] sm:$0xff]
        %v1441 = vld [vmem:[#allocation2 + $0x100] sm:$0xff]
        %v1442 = vld [vmem:[#allocation2 + $0x108] sm:$0xff]
        %v1443 = vld [vmem:[#allocation2 + $0x110] sm:$0xff]
        %v1444 = vld [vmem:[#allocation2 + $0x118] sm:$0xff]
        %v1445 = vld [vmem:[#allocation2 + $0x120] sm:$0xff]
        %v1446 = vld [vmem:[#allocation2 + $0x128] sm:$0xff]
        %v1447 = vld [vmem:[#allocation2 + $0x130] sm:$0xff]
        %v1448 = vld [vmem:[#allocation2 + $0x138] sm:$0xff]
        %v1449 = vld [vmem:[#allocation2 + $0x140] sm:$0xff]
        %v1450 = vld [vmem:[#allocation2 + $0x148] sm:$0xff]
        %v1451 = vld [vmem:[#allocation2 + $0x150] sm:$0xff]
        %v1452 = vld [vmem:[#allocation2 + $0x158] sm:$0xff]
        %v1453 = vld [vmem:[#allocation2 + $0x160] sm:$0xff]
        %v1454 = vld [vmem:[#allocation2 + $0x168] sm:$0xff]
        %v1455 = vld [vmem:[#allocation2 + $0x170] sm:$0xff]
        %v1456 = vld [vmem:[#allocation2 + $0x178] sm:$0xff]
        %v1457 = vld [vmem:[%s5] sm:$0xff]
        %v1458 = vld [vmem:[%s5 + $0x8] sm:$0xff]
        %v1459 = vld [vmem:[%s5 + $0x10] sm:$0xff]
        %v1460 = vld [vmem:[%s5 + $0x18] sm:$0xff]
        %v1461 = vld [vmem:[%s5 + $0x20] sm:$0xff]
        %v1462 = vld [vmem:[%s5 + $0x28] sm:$0xff]
        %v1463 = vld [vmem:[%s5 + $0x30] sm:$0xff]
        %v1464 = vld [vmem:[%s5 + $0x38] sm:$0xff]
        %v1465 = vld [vmem:[%s5 + $0x40] sm:$0xff]
        %v1466 = vld [vmem:[%s5 + $0x48] sm:$0xff]
        %v1467 = vld [vmem:[%s5 + $0x50] sm:$0xff]
        %v1468 = vld [vmem:[%s5 + $0x58] sm:$0xff]
        %v1469 = vld [vmem:[%s5 + $0x60] sm:$0xff]
        %v1470 = vld [vmem:[%s5 + $0x68] sm:$0xff]
        %v1471 = vld [vmem:[%s5 + $0x70] sm:$0xff]
        %v1472 = vld [vmem:[%s5 + $0x78] sm:$0xff]
        %v1473 = vld [vmem:[%s5 + $0x80] sm:$0xff]
        %v1474 = vld [vmem:[%s5 + $0x88] sm:$0xff]
        %v1475 = vld [vmem:[%s5 + $0x90] sm:$0xff]
        %v1476 = vld [vmem:[%s5 + $0x98] sm:$0xff]
        %v1477 = vld [vmem:[%s5 + $0xa0] sm:$0xff]
        %v1478 = vld [vmem:[%s5 + $0xa8] sm:$0xff]
        %v1479 = vld [vmem:[%s5 + $0xb0] sm:$0xff]
        %v1480 = vld [vmem:[%s5 + $0xb8] sm:$0xff]
        %v1481 = vld [vmem:[%s5 + $0xc0] sm:$0xff]
        %v1482 = vld [vmem:[%s5 + $0xc8] sm:$0xff]
        %v1483 = vld [vmem:[%s5 + $0xd0] sm:$0xff]
        %v1484 = vld [vmem:[%s5 + $0xd8] sm:$0xff]
        %v1485 = vld [vmem:[%s5 + $0xe0] sm:$0xff]
        %v1486 = vld [vmem:[%s5 + $0xe8] sm:$0xff]
        %v1487 = vld [vmem:[%s5 + $0xf0] sm:$0xff]
        %v1488 = vld [vmem:[%s5 + $0xf8] sm:$0xff]
        %v1489 = vld [vmem:[%s5 + $0x100] sm:$0xff]
        %v1490 = vld [vmem:[%s5 + $0x108] sm:$0xff]
        %v1491 = vld [vmem:[%s5 + $0x110] sm:$0xff]
        %v1492 = vld [vmem:[%s5 + $0x118] sm:$0xff]
        %v1493 = vld [vmem:[%s5 + $0x120] sm:$0xff]
        %v1494 = vld [vmem:[%s5 + $0x128] sm:$0xff]
        %v1495 = vld [vmem:[%s5 + $0x130] sm:$0xff]
        %v1496 = vld [vmem:[%s5 + $0x138] sm:$0xff]
        %v1497 = vld [vmem:[%s5 + $0x140] sm:$0xff]
        %v1498 = vld [vmem:[%s5 + $0x148] sm:$0xff]
        %v1499 = vld [vmem:[%s5 + $0x150] sm:$0xff]
        %v1500 = vld [vmem:[%s5 + $0x158] sm:$0xff]
        %v1501 = vld [vmem:[%s5 + $0x160] sm:$0xff]
        %v1502 = vld [vmem:[%s5 + $0x168] sm:$0xff]
        %v1503 = vld [vmem:[%s5 + $0x170] sm:$0xff]
        %v1504 = vld [vmem:[%s5 + $0x178] sm:$0xff]
        %v1505 = vadd.f32 %v1409, %v1457
        %v1506 = vadd.f32 %v1410, %v1458
        %v1507 = vadd.f32 %v1411, %v1459
        %v1508 = vadd.f32 %v1412, %v1460
        %v1509 = vadd.f32 %v1413, %v1461
        %v1510 = vadd.f32 %v1414, %v1462
        %v1511 = vadd.f32 %v1415, %v1463
        %v1512 = vadd.f32 %v1416, %v1464
        %v1513 = vadd.f32 %v1417, %v1465
        %v1514 = vadd.f32 %v1418, %v1466
        %v1515 = vadd.f32 %v1419, %v1467
        %v1516 = vadd.f32 %v1420, %v1468
        %v1517 = vadd.f32 %v1421, %v1469
        %v1518 = vadd.f32 %v1422, %v1470
        %v1519 = vadd.f32 %v1423, %v1471
        %v1520 = vadd.f32 %v1424, %v1472
        %v1521 = vadd.f32 %v1425, %v1473
        %v1522 = vadd.f32 %v1426, %v1474
        %v1523 = vadd.f32 %v1427, %v1475
        %v1524 = vadd.f32 %v1428, %v1476
        %v1525 = vadd.f32 %v1429, %v1477
        %v1526 = vadd.f32 %v1430, %v1478
        %v1527 = vadd.f32 %v1431, %v1479
        %v1528 = vadd.f32 %v1432, %v1480
        %v1529 = vadd.f32 %v1433, %v1481
        %v1530 = vadd.f32 %v1434, %v1482
        %v1531 = vadd.f32 %v1435, %v1483
        %v1532 = vadd.f32 %v1436, %v1484
        %v1533 = vadd.f32 %v1437, %v1485
        %v1534 = vadd.f32 %v1438, %v1486
        %v1535 = vadd.f32 %v1439, %v1487
        %v1536 = vadd.f32 %v1440, %v1488
        %v1537 = vadd.f32 %v1441, %v1489
        %v1538 = vadd.f32 %v1442, %v1490
        %v1539 = vadd.f32 %v1443, %v1491
        %v1540 = vadd.f32 %v1444, %v1492
        %v1541 = vadd.f32 %v1445, %v1493
        %v1542 = vadd.f32 %v1446, %v1494
        %v1543 = vadd.f32 %v1447, %v1495
        %v1544 = vadd.f32 %v1448, %v1496
        %v1545 = vadd.f32 %v1449, %v1497
        %v1546 = vadd.f32 %v1450, %v1498
        %v1547 = vadd.f32 %v1451, %v1499
        %v1548 = vadd.f32 %v1452, %v1500
        %v1549 = vadd.f32 %v1453, %v1501
        %v1550 = vadd.f32 %v1454, %v1502
        %v1551 = vadd.f32 %v1455, %v1503
        %v1552 = vadd.f32 %v1456, %v1504
        %v1553 = vpack.c.bf16 %v1506, %v1505
        %v1554 = vpack.c.bf16 %v1508, %v1507
        %v1555 = vpack.c.bf16 %v1510, %v1509
        %v1556 = vpack.c.bf16 %v1512, %v1511
        %v1557 = vpack.c.bf16 %v1514, %v1513
        %v1558 = vpack.c.bf16 %v1516, %v1515
        %v1559 = vpack.c.bf16 %v1518, %v1517
        %v1560 = vpack.c.bf16 %v1520, %v1519
        %v1561 = vpack.c.bf16 %v1522, %v1521
        %v1562 = vpack.c.bf16 %v1524, %v1523
        %v1563 = vpack.c.bf16 %v1526, %v1525
        %v1564 = vpack.c.bf16 %v1528, %v1527
        %v1565 = vpack.c.bf16 %v1530, %v1529
        %v1566 = vpack.c.bf16 %v1532, %v1531
        %v1567 = vpack.c.bf16 %v1534, %v1533
        %v1568 = vpack.c.bf16 %v1536, %v1535
        %v1569 = vpack.c.bf16 %v1538, %v1537
        %v1570 = vpack.c.bf16 %v1540, %v1539
        %v1571 = vpack.c.bf16 %v1542, %v1541
        %v1572 = vpack.c.bf16 %v1544, %v1543
        %v1573 = vpack.c.bf16 %v1546, %v1545
        %v1574 = vpack.c.bf16 %v1548, %v1547
        %v1575 = vpack.c.bf16 %v1550, %v1549
        %v1576 = vpack.c.bf16 %v1552, %v1551
        %v1577 = vld [vmem:[%s6] sm:$0xf]
        %v1578 = vld [vmem:[%s6 + $0x4] sm:$0xf]
        %v1579 = vld [vmem:[%s6 + $0x8] sm:$0xf]
        %v1580 = vld [vmem:[%s6 + $0xc] sm:$0xf]
        %v1581 = vld [vmem:[%s6 + $0x10] sm:$0xf]
        %v1582 = vld [vmem:[%s6 + $0x14] sm:$0xf]
        %v1583 = vld [vmem:[%s6 + $0x18] sm:$0xf]
        %v1584 = vld [vmem:[%s6 + $0x1c] sm:$0xf]
        %v1585 = vld [vmem:[%s6 + $0x20] sm:$0xf]
        %v1586 = vld [vmem:[%s6 + $0x24] sm:$0xf]
        %v1587 = vld [vmem:[%s6 + $0x28] sm:$0xf]
        %v1588 = vld [vmem:[%s6 + $0x2c] sm:$0xf]
        %v1589 = vld [vmem:[%s6 + $0x30] sm:$0xf]
        %v1590 = vld [vmem:[%s6 + $0x34] sm:$0xf]
        %v1591 = vld [vmem:[%s6 + $0x38] sm:$0xf]
        %v1592 = vld [vmem:[%s6 + $0x3c] sm:$0xf]
        %v1593 = vld [vmem:[%s7] sm:$0x1]
        %v1595 = vlaneseq
        %v1596 = vshrl.u32 %v1595, 7
        %v1597 = vsub.s32 0, %v1596
        %v1598 = vrot.slane %v1593, %v1597
        %v1616 = vunpack.c.l.b16 %v1577
        %v1617 = vunpack.c.l.b16 %v1578
        %v1618 = vunpack.c.l.b16 %v1579
        %v1619 = vunpack.c.l.b16 %v1580
        %v1620 = vunpack.c.l.b16 %v1581
        %v1621 = vunpack.c.l.b16 %v1582
        %v1622 = vunpack.c.l.b16 %v1583
        %v1623 = vunpack.c.l.b16 %v1584
        %v1624 = vunpack.c.l.b16 %v1585
        %v1625 = vunpack.c.l.b16 %v1586
        %v1626 = vunpack.c.l.b16 %v1587
        %v1627 = vunpack.c.l.b16 %v1588
        %v1628 = vunpack.c.l.b16 %v1589
        %v1629 = vunpack.c.l.b16 %v1590
        %v1630 = vunpack.c.l.b16 %v1591
        %v1631 = vunpack.c.l.b16 %v1592
        %v1632 = vpack.c.b16 %v1617, %v1616
        %v1633 = vpack.c.b16 %v1619, %v1618
        %v1634 = vpack.c.b16 %v1621, %v1620
        %v1635 = vpack.c.b16 %v1623, %v1622
        %v1636 = vpack.c.b16 %v1625, %v1624
        %v1637 = vpack.c.b16 %v1627, %v1626
        %v1638 = vpack.c.b16 %v1629, %v1628
        %v1639 = vpack.c.b16 %v1631, %v1630
        %1648 = vmatprep.subr.bf16.mxu0 0
        %1649 = vmatpush1.bf16.msra.mxu0 %v1632
        %1650 = vmatprep.subr.bf16.mxu0 0
        %1651 = vmatpush1.bf16.msra.mxu0 %v1633
        %1652 = vmatprep.subr.bf16.mxu0 0
        %1653 = vmatpush1.bf16.msra.mxu0 %v1634
        %1654 = vmatprep.subr.bf16.mxu0 0
        %1655 = vmatpush1.bf16.msra.mxu0 %v1635
        %1656 = vmatprep.subr.bf16.mxu0 0
        %1657 = vmatpush1.bf16.msra.mxu0 %v1636
        %1658 = vmatprep.subr.bf16.mxu0 0
        %1659 = vmatpush1.bf16.msra.mxu0 %v1637
        %1660 = vmatprep.subr.bf16.mxu0 0
        %1661 = vmatpush1.bf16.msra.mxu0 %v1638
        %1662 = vmatprep.subr.bf16.mxu0 0
        %1663 = vmatpush1.bf16.msra.mxu0 %v1639
        %1664 = vmatprep.subr.bf16.mxu0 0
        %1665 = vmatpush1.bf16.msra.mxu0 0
        %1666 = vmatprep.subr.bf16.mxu0 0
        %1667 = vmatpush1.bf16.msra.mxu0 0
        %1668 = vmatprep.subr.bf16.mxu0 0
        %1669 = vmatpush1.bf16.msra.mxu0 0
        %1670 = vmatprep.subr.bf16.mxu0 0
        %1671 = vmatpush1.bf16.msra.mxu0 0
        %1672 = vmatprep.subr.bf16.mxu0 0
        %1673 = vmatpush1.bf16.msra.mxu0 0
        %1674 = vmatprep.subr.bf16.mxu0 0
        %1675 = vmatpush1.bf16.msra.mxu0 0
        %1676 = vmatprep.subr.bf16.mxu0 0
        %1677 = vmatpush1.bf16.msra.mxu0 0
        %1678 = vmatprep.subr.bf16.mxu0 0
        %1679 = vmatpush1.bf16.msra.mxu0 0
        %1680 = vmatprep.mubr.bf16.mxu0 0
        %1681 = vmatmul.mubr.bf16.gmra.mrb[0].mxu0 %v1553
        %v1682 = vpop.f32.mrb[0].mxu0
        %v1683 = vadd.f32 %v1598, %v1682
        %v1684 = vpop.f32.mrb[0].mxu0
        %v1685 = vpop.f32.mrb[0].mxu0
        %v1686 = vadd.f32 %v1598, %v1685
        %v1687 = vpop.f32.mrb[0].mxu0
        %1688 = vmatprep.mubr.bf16.mxu0 0
        %1689 = vmatmul.mubr.bf16.gmra.mrb[0].mxu0 %v1554
        %v1690 = vpop.f32.mrb[0].mxu0
        %v1691 = vadd.f32 %v1598, %v1690
        %v1692 = vpop.f32.mrb[0].mxu0
        %v1693 = vpop.f32.mrb[0].mxu0
        %v1694 = vadd.f32 %v1598, %v1693
        %v1695 = vpop.f32.mrb[0].mxu0
        %1696 = vmatprep.mubr.bf16.mxu0 0
        %1697 = vmatmul.mubr.bf16.gmra.mrb[0].mxu0 %v1555
        %v1698 = vpop.f32.mrb[0].mxu0
        %v1699 = vadd.f32 %v1598, %v1698
        %v1700 = vpop.f32.mrb[0].mxu0
        %v1701 = vpop.f32.mrb[0].mxu0
        %v1702 = vadd.f32 %v1598, %v1701
        %v1703 = vpop.f32.mrb[0].mxu0
        %1704 = vmatprep.mubr.bf16.mxu0 0
        %1705 = vmatmul.mubr.bf16.gmra.mrb[0].mxu0 %v1556
        %v1706 = vpop.f32.mrb[0].mxu0
        %v1707 = vadd.f32 %v1598, %v1706
        %v1708 = vpop.f32.mrb[0].mxu0
        %v1709 = vpop.f32.mrb[0].mxu0
        %v1710 = vadd.f32 %v1598, %v1709
        %v1711 = vpop.f32.mrb[0].mxu0
        %1712 = vmatprep.mubr.bf16.mxu0 0
        %1713 = vmatmul.mubr.bf16.gmra.mrb[0].mxu0 %v1557
        %v1714 = vpop.f32.mrb[0].mxu0
        %v1715 = vadd.f32 %v1598, %v1714
        %v1716 = vpop.f32.mrb[0].mxu0
        %v1717 = vpop.f32.mrb[0].mxu0
        %v1718 = vadd.f32 %v1598, %v1717
        %v1719 = vpop.f32.mrb[0].mxu0
        %1720 = vmatprep.mubr.bf16.mxu0 0
        %1721 = vmatmul.mubr.bf16.gmra.mrb[0].mxu0 %v1558
        %v1722 = vpop.f32.mrb[0].mxu0
        %v1723 = vadd.f32 %v1598, %v1722
        %v1724 = vpop.f32.mrb[0].mxu0
        %v1725 = vpop.f32.mrb[0].mxu0
        %v1726 = vadd.f32 %v1598, %v1725
        %v1727 = vpop.f32.mrb[0].mxu0
        %1728 = vmatprep.mubr.bf16.mxu0 0
        %1729 = vmatmul.mubr.bf16.gmra.mrb[0].mxu0 %v1559
        %v1730 = vpop.f32.mrb[0].mxu0
        %v1731 = vadd.f32 %v1598, %v1730
        %v1732 = vpop.f32.mrb[0].mxu0
        %v1733 = vpop.f32.mrb[0].mxu0
        %v1734 = vadd.f32 %v1598, %v1733
        %v1735 = vpop.f32.mrb[0].mxu0
        %1736 = vmatprep.mubr.bf16.mxu0 0
        %1737 = vmatmul.mubr.bf16.gmra.mrb[0].mxu0 %v1560
        %v1738 = vpop.f32.mrb[0].mxu0
        %v1739 = vadd.f32 %v1598, %v1738
        %v1740 = vpop.f32.mrb[0].mxu0
        %v1741 = vpop.f32.mrb[0].mxu0
        %v1742 = vadd.f32 %v1598, %v1741
        %v1743 = vpop.f32.mrb[0].mxu0
        %1744 = vmatprep.mubr.bf16.mxu0 0
        %1745 = vmatmul.mubr.bf16.gmra.mrb[0].mxu0 %v1561
        %v1746 = vpop.f32.mrb[0].mxu0
        %v1747 = vadd.f32 %v1598, %v1746
        %v1748 = vpop.f32.mrb[0].mxu0
        %v1749 = vpop.f32.mrb[0].mxu0
        %v1750 = vadd.f32 %v1598, %v1749
        %v1751 = vpop.f32.mrb[0].mxu0
        %1752 = vmatprep.mubr.bf16.mxu0 0
        %1753 = vmatmul.mubr.bf16.gmra.mrb[0].mxu0 %v1562
        %v1754 = vpop.f32.mrb[0].mxu0
        %v1755 = vadd.f32 %v1598, %v1754
        %v1756 = vpop.f32.mrb[0].mxu0
        %v1757 = vpop.f32.mrb[0].mxu0
        %v1758 = vadd.f32 %v1598, %v1757
        %v1759 = vpop.f32.mrb[0].mxu0
        %1760 = vmatprep.mubr.bf16.mxu0 0
        %1761 = vmatmul.mubr.bf16.gmra.mrb[0].mxu0 %v1563
        %v1762 = vpop.f32.mrb[0].mxu0
        %v1763 = vadd.f32 %v1598, %v1762
        %v1764 = vpop.f32.mrb[0].mxu0
        %v1765 = vpop.f32.mrb[0].mxu0
        %v1766 = vadd.f32 %v1598, %v1765
        %v1767 = vpop.f32.mrb[0].mxu0
        %1768 = vmatprep.mubr.bf16.mxu0 0
        %1769 = vmatmul.mubr.bf16.gmra.mrb[0].mxu0 %v1564
        %v1770 = vpop.f32.mrb[0].mxu0
        %v1771 = vadd.f32 %v1598, %v1770
        %v1772 = vpop.f32.mrb[0].mxu0
        %v1773 = vpop.f32.mrb[0].mxu0
        %v1774 = vadd.f32 %v1598, %v1773
        %v1775 = vpop.f32.mrb[0].mxu0
        %1776 = vmatprep.mubr.bf16.mxu0 0
        %1777 = vmatmul.mubr.bf16.gmra.mrb[0].mxu0 %v1565
        %v1778 = vpop.f32.mrb[0].mxu0
        %v1779 = vadd.f32 %v1598, %v1778
        %v1780 = vpop.f32.mrb[0].mxu0
        %v1781 = vpop.f32.mrb[0].mxu0
        %v1782 = vadd.f32 %v1598, %v1781
        %v1783 = vpop.f32.mrb[0].mxu0
        %1784 = vmatprep.mubr.bf16.mxu0 0
        %1785 = vmatmul.mubr.bf16.gmra.mrb[0].mxu0 %v1566
        %v1786 = vpop.f32.mrb[0].mxu0
        %v1787 = vadd.f32 %v1598, %v1786
        %v1788 = vpop.f32.mrb[0].mxu0
        %v1789 = vpop.f32.mrb[0].mxu0
        %v1790 = vadd.f32 %v1598, %v1789
        %v1791 = vpop.f32.mrb[0].mxu0
        %1792 = vmatprep.mubr.bf16.mxu0 0
        %1793 = vmatmul.mubr.bf16.gmra.mrb[0].mxu0 %v1567
        %v1794 = vpop.f32.mrb[0].mxu0
        %v1795 = vadd.f32 %v1598, %v1794
        %v1796 = vpop.f32.mrb[0].mxu0
        %v1797 = vpop.f32.mrb[0].mxu0
        %v1798 = vadd.f32 %v1598, %v1797
        %v1799 = vpop.f32.mrb[0].mxu0
        %1800 = vmatprep.mubr.bf16.mxu0 0
        %1801 = vmatmul.mubr.bf16.gmra.mrb[0].mxu0 %v1568
        %v1802 = vpop.f32.mrb[0].mxu0
        %v1803 = vadd.f32 %v1598, %v1802
        %v1804 = vpop.f32.mrb[0].mxu0
        %v1805 = vpop.f32.mrb[0].mxu0
        %v1806 = vadd.f32 %v1598, %v1805
        %v1807 = vpop.f32.mrb[0].mxu0
        %1808 = vmatprep.mubr.bf16.mxu0 0
        %1809 = vmatmul.mubr.bf16.gmra.mrb[0].mxu0 %v1569
        %v1810 = vpop.f32.mrb[0].mxu0
        %v1811 = vadd.f32 %v1598, %v1810
        %v1812 = vpop.f32.mrb[0].mxu0
        %v1813 = vpop.f32.mrb[0].mxu0
        %v1814 = vadd.f32 %v1598, %v1813
        %v1815 = vpop.f32.mrb[0].mxu0
        %1816 = vmatprep.mubr.bf16.mxu0 0
        %1817 = vmatmul.mubr.bf16.gmra.mrb[0].mxu0 %v1570
        %v1818 = vpop.f32.mrb[0].mxu0
        %v1819 = vadd.f32 %v1598, %v1818
        %v1820 = vpop.f32.mrb[0].mxu0
        %v1821 = vpop.f32.mrb[0].mxu0
        %v1822 = vadd.f32 %v1598, %v1821
        %v1823 = vpop.f32.mrb[0].mxu0
        %1824 = vmatprep.mubr.bf16.mxu0 0
        %1825 = vmatmul.mubr.bf16.gmra.mrb[0].mxu0 %v1571
        %v1826 = vpop.f32.mrb[0].mxu0
        %v1827 = vadd.f32 %v1598, %v1826
        %v1828 = vpop.f32.mrb[0].mxu0
        %v1829 = vpop.f32.mrb[0].mxu0
        %v1830 = vadd.f32 %v1598, %v1829
        %v1831 = vpop.f32.mrb[0].mxu0
        %1832 = vmatprep.mubr.bf16.mxu0 0
        %1833 = vmatmul.mubr.bf16.gmra.mrb[0].mxu0 %v1572
        %v1834 = vpop.f32.mrb[0].mxu0
        %v1835 = vadd.f32 %v1598, %v1834
        %v1836 = vpop.f32.mrb[0].mxu0
        %v1837 = vpop.f32.mrb[0].mxu0
        %v1838 = vadd.f32 %v1598, %v1837
        %v1839 = vpop.f32.mrb[0].mxu0
        %1840 = vmatprep.mubr.bf16.mxu0 0
        %1841 = vmatmul.mubr.bf16.gmra.mrb[0].mxu0 %v1573
        %v1842 = vpop.f32.mrb[0].mxu0
        %v1843 = vadd.f32 %v1598, %v1842
        %v1844 = vpop.f32.mrb[0].mxu0
        %v1845 = vpop.f32.mrb[0].mxu0
        %v1846 = vadd.f32 %v1598, %v1845
        %v1847 = vpop.f32.mrb[0].mxu0
        %1848 = vmatprep.mubr.bf16.mxu0 0
        %1849 = vmatmul.mubr.bf16.gmra.mrb[0].mxu0 %v1574
        %v1850 = vpop.f32.mrb[0].mxu0
        %v1851 = vadd.f32 %v1598, %v1850
        %v1852 = vpop.f32.mrb[0].mxu0
        %v1853 = vpop.f32.mrb[0].mxu0
        %v1854 = vadd.f32 %v1598, %v1853
        %v1855 = vpop.f32.mrb[0].mxu0
        %1856 = vmatprep.mubr.bf16.mxu0 0
        %1857 = vmatmul.mubr.bf16.gmra.mrb[0].mxu0 %v1575
        %v1858 = vpop.f32.mrb[0].mxu0
        %v1859 = vadd.f32 %v1598, %v1858
        %v1860 = vpop.f32.mrb[0].mxu0
        %v1861 = vpop.f32.mrb[0].mxu0
        %v1862 = vadd.f32 %v1598, %v1861
        %v1863 = vpop.f32.mrb[0].mxu0
        %1864 = vmatprep.mubr.bf16.mxu0 0
        %1865 = vmatmul.mubr.bf16.gmra.mrb[0].mxu0 %v1576
        %v1866 = vpop.f32.mrb[0].mxu0
        %v1867 = vadd.f32 %v1598, %v1866
        %v1868 = vpop.f32.mrb[0].mxu0
        %v1869 = vpop.f32.mrb[0].mxu0
        %v1870 = vadd.f32 %v1598, %v1869
        %v1871 = vpop.f32.mrb[0].mxu0
        %1872 = vdwg.mxu0
        %v1873 = vmax.f32 %v1683, 0.0
        %v1874 = vmax.f32 %v1686, 0.0
        %v1875 = vmax.f32 %v1691, 0.0
        %v1876 = vmax.f32 %v1694, 0.0
        %v1877 = vmax.f32 %v1699, 0.0
        %v1878 = vmax.f32 %v1702, 0.0
        %v1879 = vmax.f32 %v1707, 0.0
        %v1880 = vmax.f32 %v1710, 0.0
        %v1881 = vmax.f32 %v1715, 0.0
        %v1882 = vmax.f32 %v1718, 0.0
        %v1883 = vmax.f32 %v1723, 0.0
        %v1884 = vmax.f32 %v1726, 0.0
        %v1885 = vmax.f32 %v1731, 0.0
        %v1886 = vmax.f32 %v1734, 0.0
        %v1887 = vmax.f32 %v1739, 0.0
        %v1888 = vmax.f32 %v1742, 0.0
        %v1889 = vmax.f32 %v1747, 0.0
        %v1890 = vmax.f32 %v1750, 0.0
        %v1891 = vmax.f32 %v1755, 0.0
        %v1892 = vmax.f32 %v1758, 0.0
        %v1893 = vmax.f32 %v1763, 0.0
        %v1894 = vmax.f32 %v1766, 0.0
        %v1895 = vmax.f32 %v1771, 0.0
        %v1896 = vmax.f32 %v1774, 0.0
        %v1897 = vmax.f32 %v1779, 0.0
        %v1898 = vmax.f32 %v1782, 0.0
        %v1899 = vmax.f32 %v1787, 0.0
        %v1900 = vmax.f32 %v1790, 0.0
        %v1901 = vmax.f32 %v1795, 0.0
        %v1902 = vmax.f32 %v1798, 0.0
        %v1903 = vmax.f32 %v1803, 0.0
        %v1904 = vmax.f32 %v1806, 0.0
        %v1905 = vmax.f32 %v1811, 0.0
        %v1906 = vmax.f32 %v1814, 0.0
        %v1907 = vmax.f32 %v1819, 0.0
        %v1908 = vmax.f32 %v1822, 0.0
        %v1909 = vmax.f32 %v1827, 0.0
        %v1910 = vmax.f32 %v1830, 0.0
        %v1911 = vmax.f32 %v1835, 0.0
        %v1912 = vmax.f32 %v1838, 0.0
        %v1913 = vmax.f32 %v1843, 0.0
        %v1914 = vmax.f32 %v1846, 0.0
        %v1915 = vmax.f32 %v1851, 0.0
        %v1916 = vmax.f32 %v1854, 0.0
        %v1917 = vmax.f32 %v1859, 0.0
        %v1918 = vmax.f32 %v1862, 0.0
        %v1919 = vmax.f32 %v1867, 0.0
        %v1920 = vmax.f32 %v1870, 0.0
        %v1921 = vld [vmem:[%s3] sm:$0x7]
        %v1922 = vld [vmem:[#allocation3] sm:$0x7]
        %v1923 = vmul.f32 %v1922, %v1921
        %v1924 = vmul.f32 %v1921, %v1921
        %v1925 = vadd.f32 %v1923, %v1924
        %v1927 = vlaneseq
        %v1928 = vshrl.u32 %v1927, 7
        %v1929 = vsub.s32 0, %v1928
        %v1930 = vrot.slane %v1925, %v1929
        %v1931 = vlaneseq
        %v1932 = vshrl.u32 %v1931, 7
        %v1933 = vsub.s32 1, %v1932
        %v1934 = vrot.slane %v1925, %v1933
        %v1935 = vlaneseq
        %v1936 = vshrl.u32 %v1935, 7
        %v1937 = vsub.s32 2, %v1936
        %v1938 = vrot.slane %v1925, %v1937
        %v1942 = vpack.c.bf16 %v1930, %v1930
        %v1943 = vpack.c.bf16 %v1934, %v1934
        %v1944 = vpack.c.bf16 %v1938, %v1938
        %v1945 = vpack.c.bf16 %v1874, %v1873
        %v1946 = vpack.c.bf16 %v1876, %v1875
        %v1947 = vpack.c.bf16 %v1878, %v1877
        %v1948 = vpack.c.bf16 %v1880, %v1879
        %v1949 = vpack.c.bf16 %v1882, %v1881
        %v1950 = vpack.c.bf16 %v1884, %v1883
        %v1951 = vpack.c.bf16 %v1886, %v1885
        %v1952 = vpack.c.bf16 %v1888, %v1887
        %v1953 = vpack.c.bf16 %v1890, %v1889
        %v1954 = vpack.c.bf16 %v1892, %v1891
        %v1955 = vpack.c.bf16 %v1894, %v1893
        %v1956 = vpack.c.bf16 %v1896, %v1895
        %v1957 = vpack.c.bf16 %v1898, %v1897
        %v1958 = vpack.c.bf16 %v1900, %v1899
        %v1959 = vpack.c.bf16 %v1902, %v1901
        %v1960 = vpack.c.bf16 %v1904, %v1903
        %v1961 = vpack.c.bf16 %v1906, %v1905
        %v1962 = vpack.c.bf16 %v1908, %v1907
        %v1963 = vpack.c.bf16 %v1910, %v1909
        %v1964 = vpack.c.bf16 %v1912, %v1911
        %v1965 = vpack.c.bf16 %v1914, %v1913
        %v1966 = vpack.c.bf16 %v1916, %v1915
        %v1967 = vpack.c.bf16 %v1918, %v1917
        %v1968 = vpack.c.bf16 %v1920, %v1919
        %1969 = vmatprep.subr.bf16.mxu0 0
        %1970 = vmatpush1.bf16.msra.mxu0 %v1945
        %1971 = vmatprep.subr.bf16.mxu0 0
        %1972 = vmatpush1.bf16.msra.mxu0 %v1946
        %1973 = vmatprep.subr.bf16.mxu0 0
        %1974 = vmatpush1.bf16.msra.mxu0 %v1947
        %1975 = vmatprep.subr.bf16.mxu0 0
        %1976 = vmatpush1.bf16.msra.mxu0 %v1948
        %1977 = vmatprep.subr.bf16.mxu0 0
        %1978 = vmatpush1.bf16.msra.mxu0 %v1949
        %1979 = vmatprep.subr.bf16.mxu0 0
        %1980 = vmatpush1.bf16.msra.mxu0 %v1950
        %1981 = vmatprep.subr.bf16.mxu0 0
        %1982 = vmatpush1.bf16.msra.mxu0 %v1951
        %1983 = vmatprep.subr.bf16.mxu0 0
        %1984 = vmatpush1.bf16.msra.mxu0 %v1952
        %1985 = vmatprep.subr.bf16.mxu0 0
        %1986 = vmatpush1.bf16.msra.mxu0 %v1953
        %1987 = vmatprep.subr.bf16.mxu0 0
        %1988 = vmatpush1.bf16.msra.mxu0 %v1954
        %1989 = vmatprep.subr.bf16.mxu0 0
        %1990 = vmatpush1.bf16.msra.mxu0 %v1955
        %1991 = vmatprep.subr.bf16.mxu0 0
        %1992 = vmatpush1.bf16.msra.mxu0 %v1956
        %1993 = vmatprep.subr.bf16.mxu0 0
        %1994 = vmatpush1.bf16.msra.mxu0 %v1957
        %1995 = vmatprep.subr.bf16.mxu0 0
        %1996 = vmatpush1.bf16.msra.mxu0 %v1958
        %1997 = vmatprep.subr.bf16.mxu0 0
        %1998 = vmatpush1.bf16.msra.mxu0 %v1959
        %1999 = vmatprep.subr.bf16.mxu0 0
        %2000 = vmatpush1.bf16.msra.mxu0 %v1960
        %2001 = vmatprep.mubr.bf16.mxu0 %v1943
        %2002 = vmatmul.mubr.bf16.gmra.mrb[0].mxu0 %v1942
        %v2003 = vpop.f32.mrb[0].mxu0
        %v2004 = vadd.f32 0.0, %v2003
        %v2005 = vpop.f32.mrb[0].mxu0
        %v2006 = vpop.f32.mrb[0].mxu0
        %v2007 = vpop.f32.mrb[0].mxu0
        %2008 = vdwg.mxu0
        %2009 = vmatprep.subr.bf16.mxu0 0
        %2010 = vmatpush1.bf16.msra.mxu0 %v1961
        %2011 = vmatprep.subr.bf16.mxu0 0
        %2012 = vmatpush1.bf16.msra.mxu0 %v1962
        %2013 = vmatprep.subr.bf16.mxu0 0
        %2014 = vmatpush1.bf16.msra.mxu0 %v1963
        %2015 = vmatprep.subr.bf16.mxu0 0
        %2016 = vmatpush1.bf16.msra.mxu0 %v1964
        %2017 = vmatprep.subr.bf16.mxu0 0
        %2018 = vmatpush1.bf16.msra.mxu0 %v1965
        %2019 = vmatprep.subr.bf16.mxu0 0
        %2020 = vmatpush1.bf16.msra.mxu0 %v1966
        %2021 = vmatprep.subr.bf16.mxu0 0
        %2022 = vmatpush1.bf16.msra.mxu0 %v1967
        %2023 = vmatprep.subr.bf16.mxu0 0
        %2024 = vmatpush1.bf16.msra.mxu0 %v1968
        %2025 = vmatprep.subr.bf16.mxu0 0
        %2026 = vmatpush1.bf16.msra.mxu0 0
        %2027 = vmatprep.subr.bf16.mxu0 0
        %2028 = vmatpush1.bf16.msra.mxu0 0
        %2029 = vmatprep.subr.bf16.mxu0 0
        %2030 = vmatpush1.bf16.msra.mxu0 0
        %2031 = vmatprep.subr.bf16.mxu0 0
        %2032 = vmatpush1.bf16.msra.mxu0 0
        %2033 = vmatprep.subr.bf16.mxu0 0
        %2034 = vmatpush1.bf16.msra.mxu0 0
        %2035 = vmatprep.subr.bf16.mxu0 0
        %2036 = vmatpush1.bf16.msra.mxu0 0
        %2037 = vmatprep.subr.bf16.mxu0 0
        %2038 = vmatpush1.bf16.msra.mxu0 0
        %2039 = vmatprep.subr.bf16.mxu0 0
        %2040 = vmatpush1.bf16.msra.mxu0 0
        %2041 = vmatprep.mubr.bf16.mxu0 0
        %2042 = vmatmul.mubr.bf16.gmra.mrb[0].mxu0 %v1944
        %v2043 = vpop.f32.mrb[0].mxu0
        %v2044 = vadd.f32 %v2004, %v2043
        %v2045 = vpop.f32.mrb[0].mxu0
        %v2046 = vpop.f32.mrb[0].mxu0
        %v2047 = vpop.f32.mrb[0].mxu0
        %2048 = vdwg.mxu0
        %v2049 = vmul.f32 %v2044, 0.0033333334
        %v2050 = vpack.c.bf16 %v2049, %v2049
        %v2051 = vld [vmem:[%s8] sm:$0xf]
        %v2052 = vld [vmem:[%s8 + $0x4] sm:$0xf]
        %v2053 = vld [vmem:[%s8 + $0x8] sm:$0xf]
        %v2054 = vld [vmem:[%s8 + $0xc] sm:$0xf]
        %v2055 = vld [vmem:[%s8 + $0x10] sm:$0xf]
        %v2056 = vld [vmem:[%s8 + $0x14] sm:$0xf]
        %v2057 = vld [vmem:[%s8 + $0x18] sm:$0xf]
        %v2058 = vld [vmem:[%s8 + $0x1c] sm:$0xf]
        %v2059 = vld [vmem:[%s8 + $0x20] sm:$0xf]
        %v2060 = vld [vmem:[%s8 + $0x24] sm:$0xf]
        %v2061 = vld [vmem:[%s8 + $0x28] sm:$0xf]
        %v2062 = vld [vmem:[%s8 + $0x2c] sm:$0xf]
        %v2063 = vld [vmem:[%s8 + $0x30] sm:$0xf]
        %v2064 = vld [vmem:[%s8 + $0x34] sm:$0xf]
        %v2065 = vld [vmem:[%s8 + $0x38] sm:$0xf]
        %v2066 = vld [vmem:[%s8 + $0x3c] sm:$0xf]
        %v2067 = vld [vmem:[%s9] sm:$0x1]
        %v2084 = vunpack.c.l.b16 %v2051
        %v2085 = vunpack.c.l.b16 %v2052
        %v2086 = vunpack.c.l.b16 %v2053
        %v2087 = vunpack.c.l.b16 %v2054
        %v2088 = vunpack.c.l.b16 %v2055
        %v2089 = vunpack.c.l.b16 %v2056
        %v2090 = vunpack.c.l.b16 %v2057
        %v2091 = vunpack.c.l.b16 %v2058
        %v2092 = vunpack.c.l.b16 %v2059
        %v2093 = vunpack.c.l.b16 %v2060
        %v2094 = vunpack.c.l.b16 %v2061
        %v2095 = vunpack.c.l.b16 %v2062
        %v2096 = vunpack.c.l.b16 %v2063
        %v2097 = vunpack.c.l.b16 %v2064
        %v2098 = vunpack.c.l.b16 %v2065
        %v2099 = vunpack.c.l.b16 %v2066
        %v2100 = vpack.c.b16 %v2085, %v2084
        %v2101 = vpack.c.b16 %v2087, %v2086
        %v2102 = vpack.c.b16 %v2089, %v2088
        %v2103 = vpack.c.b16 %v2091, %v2090
        %v2104 = vpack.c.b16 %v2093, %v2092
        %v2105 = vpack.c.b16 %v2095, %v2094
        %v2106 = vpack.c.b16 %v2097, %v2096
        %v2107 = vpack.c.b16 %v2099, %v2098
        %2116 = vmatprep.subr.bf16.mxu0 0
        %2117 = vmatpush1.bf16.msra.mxu0 %v2100
        %2118 = vmatprep.subr.bf16.mxu0 0
        %2119 = vmatpush1.bf16.msra.mxu0 %v2101
        %2120 = vmatprep.subr.bf16.mxu0 0
        %2121 = vmatpush1.bf16.msra.mxu0 %v2102
        %2122 = vmatprep.subr.bf16.mxu0 0
        %2123 = vmatpush1.bf16.msra.mxu0 %v2103
        %2124 = vmatprep.subr.bf16.mxu0 0
        %2125 = vmatpush1.bf16.msra.mxu0 %v2104
        %2126 = vmatprep.subr.bf16.mxu0 0
        %2127 = vmatpush1.bf16.msra.mxu0 %v2105
        %2128 = vmatprep.subr.bf16.mxu0 0
        %2129 = vmatpush1.bf16.msra.mxu0 %v2106
        %2130 = vmatprep.subr.bf16.mxu0 0
        %2131 = vmatpush1.bf16.msra.mxu0 %v2107
        %2132 = vmatprep.subr.bf16.mxu0 0
        %2133 = vmatpush1.bf16.msra.mxu0 0
        %2134 = vmatprep.subr.bf16.mxu0 0
        %2135 = vmatpush1.bf16.msra.mxu0 0
        %2136 = vmatprep.subr.bf16.mxu0 0
        %2137 = vmatpush1.bf16.msra.mxu0 0
        %2138 = vmatprep.subr.bf16.mxu0 0
        %2139 = vmatpush1.bf16.msra.mxu0 0
        %2140 = vmatprep.subr.bf16.mxu0 0
        %2141 = vmatpush1.bf16.msra.mxu0 0
        %2142 = vmatprep.subr.bf16.mxu0 0
        %2143 = vmatpush1.bf16.msra.mxu0 0
        %2144 = vmatprep.subr.bf16.mxu0 0
        %2145 = vmatpush1.bf16.msra.mxu0 0
        %2146 = vmatprep.subr.bf16.mxu0 0
        %2147 = vmatpush1.bf16.msra.mxu0 0
        %2148 = vmatprep.mubr.bf16.mxu0 0
        %2149 = vmatmul.mubr.bf16.gmra.mrb[0].mxu0 %v2050
        %v2150 = vpop.f32.mrb[0].mxu0
        %v2151 = vadd.f32 %v2067, %v2150
        %v2152 = vpop.f32.mrb[0].mxu0
        %v2153 = vpop.f32.mrb[0].mxu0
        %v2154 = vpop.f32.mrb[0].mxu0
        %2155 = vdwg.mxu0
        %v2156 = vld [vmem:[%s10] sm:$0x1]
        %v2157 = vpack.c.bf16 %v2156, %v2156
        %v2158 = vld [vmem:[%s11] sm:$0xf]
        %v2159 = vld [vmem:[%s11 + $0x4] sm:$0xf]
        %v2160 = vld [vmem:[%s11 + $0x8] sm:$0xf]
        %v2161 = vld [vmem:[%s11 + $0xc] sm:$0xf]
        %v2162 = vld [vmem:[%s11 + $0x10] sm:$0xf]
        %v2163 = vld [vmem:[%s11 + $0x14] sm:$0xf]
        %v2164 = vld [vmem:[%s11 + $0x18] sm:$0xf]
        %v2165 = vld [vmem:[%s11 + $0x1c] sm:$0xf]
        %v2166 = vld [vmem:[%s11 + $0x20] sm:$0xf]
        %v2167 = vld [vmem:[%s11 + $0x24] sm:$0xf]
        %v2168 = vld [vmem:[%s11 + $0x28] sm:$0xf]
        %v2169 = vld [vmem:[%s11 + $0x2c] sm:$0xf]
        %v2170 = vld [vmem:[%s11 + $0x30] sm:$0xf]
        %v2171 = vld [vmem:[%s11 + $0x34] sm:$0xf]
        %v2172 = vld [vmem:[%s11 + $0x38] sm:$0xf]
        %v2173 = vld [vmem:[%s11 + $0x3c] sm:$0xf]
        %v2174 = vld [vmem:[%s12] sm:$0x1]
        %v2191 = vunpack.c.l.b16 %v2158
        %v2192 = vunpack.c.l.b16 %v2159
        %v2193 = vunpack.c.l.b16 %v2160
        %v2194 = vunpack.c.l.b16 %v2161
        %v2195 = vunpack.c.l.b16 %v2162
        %v2196 = vunpack.c.l.b16 %v2163
        %v2197 = vunpack.c.l.b16 %v2164
        %v2198 = vunpack.c.l.b16 %v2165
        %v2199 = vunpack.c.l.b16 %v2166
        %v2200 = vunpack.c.l.b16 %v2167
        %v2201 = vunpack.c.l.b16 %v2168
        %v2202 = vunpack.c.l.b16 %v2169
        %v2203 = vunpack.c.l.b16 %v2170
        %v2204 = vunpack.c.l.b16 %v2171
        %v2205 = vunpack.c.l.b16 %v2172
        %v2206 = vunpack.c.l.b16 %v2173
        %v2207 = vpack.c.b16 %v2192, %v2191
        %v2208 = vpack.c.b16 %v2194, %v2193
        %v2209 = vpack.c.b16 %v2196, %v2195
        %v2210 = vpack.c.b16 %v2198, %v2197
        %v2211 = vpack.c.b16 %v2200, %v2199
        %v2212 = vpack.c.b16 %v2202, %v2201
        %v2213 = vpack.c.b16 %v2204, %v2203
        %v2214 = vpack.c.b16 %v2206, %v2205
        %2223 = vmatprep.subr.bf16.mxu0 0
        %2224 = vmatpush1.bf16.msra.mxu0 %v2207
        %2225 = vmatprep.subr.bf16.mxu0 0
        %2226 = vmatpush1.bf16.msra.mxu0 %v2208
        %2227 = vmatprep.subr.bf16.mxu0 0
        %2228 = vmatpush1.bf16.msra.mxu0 %v2209
        %2229 = vmatprep.subr.bf16.mxu0 0
        %2230 = vmatpush1.bf16.msra.mxu0 %v2210
        %2231 = vmatprep.subr.bf16.mxu0 0
        %2232 = vmatpush1.bf16.msra.mxu0 %v2211
        %2233 = vmatprep.subr.bf16.mxu0 0
        %2234 = vmatpush1.bf16.msra.mxu0 %v2212
        %2235 = vmatprep.subr.bf16.mxu0 0
        %2236 = vmatpush1.bf16.msra.mxu0 %v2213
        %2237 = vmatprep.subr.bf16.mxu0 0
        %2238 = vmatpush1.bf16.msra.mxu0 %v2214
        %2239 = vmatprep.subr.bf16.mxu0 0
        %2240 = vmatpush1.bf16.msra.mxu0 0
        %2241 = vmatprep.subr.bf16.mxu0 0
        %2242 = vmatpush1.bf16.msra.mxu0 0
        %2243 = vmatprep.subr.bf16.mxu0 0
        %2244 = vmatpush1.bf16.msra.mxu0 0
        %2245 = vmatprep.subr.bf16.mxu0 0
        %2246 = vmatpush1.bf16.msra.mxu0 0
        %2247 = vmatprep.subr.bf16.mxu0 0
        %2248 = vmatpush1.bf16.msra.mxu0 0
        %2249 = vmatprep.subr.bf16.mxu0 0
        %2250 = vmatpush1.bf16.msra.mxu0 0
        %2251 = vmatprep.subr.bf16.mxu0 0
        %2252 = vmatpush1.bf16.msra.mxu0 0
        %2253 = vmatprep.subr.bf16.mxu0 0
        %2254 = vmatpush1.bf16.msra.mxu0 0
        %2255 = vmatprep.mubr.bf16.mxu0 0
        %2256 = vmatmul.mubr.bf16.gmra.mrb[0].mxu0 %v2157
        %v2257 = vpop.f32.mrb[0].mxu0
        %v2258 = vadd.f32 %v2174, %v2257
        %v2259 = vpop.f32.mrb[0].mxu0
        %v2260 = vpop.f32.mrb[0].mxu0
        %v2261 = vpop.f32.mrb[0].mxu0
        %2262 = vdwg.mxu0
        %v2263 = vmax.f32 %v2258, 0.0
        %v2264 = vpack.c.bf16 %v2263, %v2263
        %v2265 = vld [vmem:[%s13] sm:$0xf]
        %v2266 = vld [vmem:[%s13 + $0x4] sm:$0xf]
        %v2267 = vld [vmem:[%s13 + $0x8] sm:$0xf]
        %v2268 = vld [vmem:[%s13 + $0xc] sm:$0xf]
        %v2269 = vld [vmem:[%s13 + $0x10] sm:$0xf]
        %v2270 = vld [vmem:[%s13 + $0x14] sm:$0xf]
        %v2271 = vld [vmem:[%s13 + $0x18] sm:$0xf]
        %v2272 = vld [vmem:[%s13 + $0x1c] sm:$0xf]
        %v2273 = vld [vmem:[%s13 + $0x20] sm:$0xf]
        %v2274 = vld [vmem:[%s13 + $0x24] sm:$0xf]
        %v2275 = vld [vmem:[%s13 + $0x28] sm:$0xf]
        %v2276 = vld [vmem:[%s13 + $0x2c] sm:$0xf]
        %v2277 = vld [vmem:[%s13 + $0x30] sm:$0xf]
        %v2278 = vld [vmem:[%s13 + $0x34] sm:$0xf]
        %v2279 = vld [vmem:[%s13 + $0x38] sm:$0xf]
        %v2280 = vld [vmem:[%s13 + $0x3c] sm:$0xf]
        %v2281 = vpack.c.bf16 %v2151, %v2151
        %v2282 = vld [vmem:[%s14] sm:$0xf]
        %v2283 = vld [vmem:[%s14 + $0x4] sm:$0xf]
        %v2284 = vld [vmem:[%s14 + $0x8] sm:$0xf]
        %v2285 = vld [vmem:[%s14 + $0xc] sm:$0xf]
        %v2286 = vld [vmem:[%s14 + $0x10] sm:$0xf]
        %v2287 = vld [vmem:[%s14 + $0x14] sm:$0xf]
        %v2288 = vld [vmem:[%s14 + $0x18] sm:$0xf]
        %v2289 = vld [vmem:[%s14 + $0x1c] sm:$0xf]
        %v2290 = vld [vmem:[%s14 + $0x20] sm:$0xf]
        %v2291 = vld [vmem:[%s14 + $0x24] sm:$0xf]
        %v2292 = vld [vmem:[%s14 + $0x28] sm:$0xf]
        %v2293 = vld [vmem:[%s14 + $0x2c] sm:$0xf]
        %v2294 = vld [vmem:[%s14 + $0x30] sm:$0xf]
        %v2295 = vld [vmem:[%s14 + $0x34] sm:$0xf]
        %v2296 = vld [vmem:[%s14 + $0x38] sm:$0xf]
        %v2297 = vld [vmem:[%s14 + $0x3c] sm:$0xf]
        %v2314 = vunpack.c.l.b16 %v2282
        %v2315 = vunpack.c.l.b16 %v2283
        %v2316 = vunpack.c.l.b16 %v2284
        %v2317 = vunpack.c.l.b16 %v2285
        %v2318 = vunpack.c.l.b16 %v2286
        %v2319 = vunpack.c.l.b16 %v2287
        %v2320 = vunpack.c.l.b16 %v2288
        %v2321 = vunpack.c.l.b16 %v2289
        %v2322 = vunpack.c.l.b16 %v2290
        %v2323 = vunpack.c.l.b16 %v2291
        %v2324 = vunpack.c.l.b16 %v2292
        %v2325 = vunpack.c.l.b16 %v2293
        %v2326 = vunpack.c.l.b16 %v2294
        %v2327 = vunpack.c.l.b16 %v2295
        %v2328 = vunpack.c.l.b16 %v2296
        %v2329 = vunpack.c.l.b16 %v2297
        %v2330 = vpack.c.b16 %v2315, %v2314
        %v2331 = vpack.c.b16 %v2317, %v2316
        %v2332 = vpack.c.b16 %v2319, %v2318
        %v2333 = vpack.c.b16 %v2321, %v2320
        %v2334 = vpack.c.b16 %v2323, %v2322
        %v2335 = vpack.c.b16 %v2325, %v2324
        %v2336 = vpack.c.b16 %v2327, %v2326
        %v2337 = vpack.c.b16 %v2329, %v2328
        %2346 = vmatprep.subr.bf16.mxu0 0
        %2347 = vmatpush1.bf16.msra.mxu0 %v2330
        %2348 = vmatprep.subr.bf16.mxu0 0
        %2349 = vmatpush1.bf16.msra.mxu0 %v2331
        %2350 = vmatprep.subr.bf16.mxu0 0
        %2351 = vmatpush1.bf16.msra.mxu0 %v2332
        %2352 = vmatprep.subr.bf16.mxu0 0
        %2353 = vmatpush1.bf16.msra.mxu0 %v2333
        %2354 = vmatprep.subr.bf16.mxu0 0
        %2355 = vmatpush1.bf16.msra.mxu0 %v2334
        %2356 = vmatprep.subr.bf16.mxu0 0
        %2357 = vmatpush1.bf16.msra.mxu0 %v2335
        %2358 = vmatprep.subr.bf16.mxu0 0
        %2359 = vmatpush1.bf16.msra.mxu0 %v2336
        %2360 = vmatprep.subr.bf16.mxu0 0
        %2361 = vmatpush1.bf16.msra.mxu0 %v2337
        %2362 = vmatprep.subr.bf16.mxu0 0
        %2363 = vmatpush1.bf16.msra.mxu0 0
        %2364 = vmatprep.subr.bf16.mxu0 0
        %2365 = vmatpush1.bf16.msra.mxu0 0
        %2366 = vmatprep.subr.bf16.mxu0 0
        %2367 = vmatpush1.bf16.msra.mxu0 0
        %2368 = vmatprep.subr.bf16.mxu0 0
        %2369 = vmatpush1.bf16.msra.mxu0 0
        %2370 = vmatprep.subr.bf16.mxu0 0
        %2371 = vmatpush1.bf16.msra.mxu0 0
        %2372 = vmatprep.subr.bf16.mxu0 0
        %2373 = vmatpush1.bf16.msra.mxu0 0
        %2374 = vmatprep.subr.bf16.mxu0 0
        %2375 = vmatpush1.bf16.msra.mxu0 0
        %2376 = vmatprep.subr.bf16.mxu0 0
        %2377 = vmatpush1.bf16.msra.mxu0 0
        %2378 = vmatprep.mubr.bf16.mxu0 0
        %2379 = vmatmul.mubr.bf16.gmra.mrb[0].mxu0 %v2281
        %v2380 = vpop.f32.mrb[0].mxu0
        %v2381 = vadd.f32 0.0, %v2380
        %v2382 = vpop.f32.mrb[0].mxu0
        %v2383 = vpop.f32.mrb[0].mxu0
        %v2384 = vpop.f32.mrb[0].mxu0
        %2385 = vdwg.mxu0
        %v2402 = vunpack.c.l.b16 %v2265
        %v2403 = vunpack.c.l.b16 %v2266
        %v2404 = vunpack.c.l.b16 %v2267
        %v2405 = vunpack.c.l.b16 %v2268
        %v2406 = vunpack.c.l.b16 %v2269
        %v2407 = vunpack.c.l.b16 %v2270
        %v2408 = vunpack.c.l.b16 %v2271
        %v2409 = vunpack.c.l.b16 %v2272
        %v2410 = vunpack.c.l.b16 %v2273
        %v2411 = vunpack.c.l.b16 %v2274
        %v2412 = vunpack.c.l.b16 %v2275
        %v2413 = vunpack.c.l.b16 %v2276
        %v2414 = vunpack.c.l.b16 %v2277
        %v2415 = vunpack.c.l.b16 %v2278
        %v2416 = vunpack.c.l.b16 %v2279
        %v2417 = vunpack.c.l.b16 %v2280
        %v2418 = vpack.c.b16 %v2403, %v2402
        %v2419 = vpack.c.b16 %v2405, %v2404
        %v2420 = vpack.c.b16 %v2407, %v2406
        %v2421 = vpack.c.b16 %v2409, %v2408
        %v2422 = vpack.c.b16 %v2411, %v2410
        %v2423 = vpack.c.b16 %v2413, %v2412
        %v2424 = vpack.c.b16 %v2415, %v2414
        %v2425 = vpack.c.b16 %v2417, %v2416
        %2434 = vmatprep.subr.bf16.mxu0 0
        %2435 = vmatpush1.bf16.msra.mxu0 %v2418
        %2436 = vmatprep.subr.bf16.mxu0 0
        %2437 = vmatpush1.bf16.msra.mxu0 %v2419
        %2438 = vmatprep.subr.bf16.mxu0 0
        %2439 = vmatpush1.bf16.msra.mxu0 %v2420
        %2440 = vmatprep.subr.bf16.mxu0 0
        %2441 = vmatpush1.bf16.msra.mxu0 %v2421
        %2442 = vmatprep.subr.bf16.mxu0 0
        %2443 = vmatpush1.bf16.msra.mxu0 %v2422
        %2444 = vmatprep.subr.bf16.mxu0 0
        %2445 = vmatpush1.bf16.msra.mxu0 %v2423
        %2446 = vmatprep.subr.bf16.mxu0 0
        %2447 = vmatpush1.bf16.msra.mxu0 %v2424
        %2448 = vmatprep.subr.bf16.mxu0 0
        %2449 = vmatpush1.bf16.msra.mxu0 %v2425
        %2450 = vmatprep.subr.bf16.mxu0 0
        %2451 = vmatpush1.bf16.msra.mxu0 0
        %2452 = vmatprep.subr.bf16.mxu0 0
        %2453 = vmatpush1.bf16.msra.mxu0 0
        %2454 = vmatprep.subr.bf16.mxu0 0
        %2455 = vmatpush1.bf16.msra.mxu0 0
        %2456 = vmatprep.subr.bf16.mxu0 0
        %2457 = vmatpush1.bf16.msra.mxu0 0
        %2458 = vmatprep.subr.bf16.mxu0 0
        %2459 = vmatpush1.bf16.msra.mxu0 0
        %2460 = vmatprep.subr.bf16.mxu0 0
        %2461 = vmatpush1.bf16.msra.mxu0 0
        %2462 = vmatprep.subr.bf16.mxu0 0
        %2463 = vmatpush1.bf16.msra.mxu0 0
        %2464 = vmatprep.subr.bf16.mxu0 0
        %2465 = vmatpush1.bf16.msra.mxu0 0
        %2466 = vmatprep.mubr.bf16.mxu0 0
        %2467 = vmatmul.mubr.bf16.gmra.mrb[0].mxu0 %v2264
        %v2468 = vpop.f32.mrb[0].mxu0
        %v2469 = vadd.f32 %v2381, %v2468
        %v2470 = vpop.f32.mrb[0].mxu0
        %v2471 = vpop.f32.mrb[0].mxu0
        %v2472 = vpop.f32.mrb[0].mxu0
        %2473 = vdwg.mxu0
        %v2474 = vld [vmem:[%s15] sm:$0x1]
        %v2475 = vadd.f32 %v2469, %v2474
        %v2476 = vmax.f32 %v2475, 0.0
        %v2477 = vpack.c.bf16 %v2476, %v2476
        %v2478 = vld [vmem:[%s16] sm:$0xf]
        %v2479 = vld [vmem:[%s16 + $0x4] sm:$0xf]
        %v2480 = vld [vmem:[%s16 + $0x8] sm:$0xf]
        %v2481 = vld [vmem:[%s16 + $0xc] sm:$0xf]
        %v2482 = vld [vmem:[%s16 + $0x10] sm:$0xf]
        %v2483 = vld [vmem:[%s16 + $0x14] sm:$0xf]
        %v2484 = vld [vmem:[%s16 + $0x18] sm:$0xf]
        %v2485 = vld [vmem:[%s16 + $0x1c] sm:$0xf]
        %v2486 = vld [vmem:[%s16 + $0x20] sm:$0xf]
        %v2487 = vld [vmem:[%s16 + $0x24] sm:$0xf]
        %v2488 = vld [vmem:[%s16 + $0x28] sm:$0xf]
        %v2489 = vld [vmem:[%s16 + $0x2c] sm:$0xf]
        %v2490 = vld [vmem:[%s16 + $0x30] sm:$0xf]
        %v2491 = vld [vmem:[%s16 + $0x34] sm:$0xf]
        %v2492 = vld [vmem:[%s16 + $0x38] sm:$0xf]
        %v2493 = vld [vmem:[%s16 + $0x3c] sm:$0xf]
        %v2494 = vld [vmem:[%s17] sm:$0x1]
        %v2511 = vunpack.c.l.b16 %v2478
        %v2512 = vunpack.c.l.b16 %v2479
        %v2513 = vunpack.c.l.b16 %v2480
        %v2514 = vunpack.c.l.b16 %v2481
        %v2515 = vunpack.c.l.b16 %v2482
        %v2516 = vunpack.c.l.b16 %v2483
        %v2517 = vunpack.c.l.b16 %v2484
        %v2518 = vunpack.c.l.b16 %v2485
        %v2519 = vunpack.c.l.b16 %v2486
        %v2520 = vunpack.c.l.b16 %v2487
        %v2521 = vunpack.c.l.b16 %v2488
        %v2522 = vunpack.c.l.b16 %v2489
        %v2523 = vunpack.c.l.b16 %v2490
        %v2524 = vunpack.c.l.b16 %v2491
        %v2525 = vunpack.c.l.b16 %v2492
        %v2526 = vunpack.c.l.b16 %v2493
        %v2527 = vpack.c.b16 %v2512, %v2511
        %v2528 = vpack.c.b16 %v2514, %v2513
        %v2529 = vpack.c.b16 %v2516, %v2515
        %v2530 = vpack.c.b16 %v2518, %v2517
        %v2531 = vpack.c.b16 %v2520, %v2519
        %v2532 = vpack.c.b16 %v2522, %v2521
        %v2533 = vpack.c.b16 %v2524, %v2523
        %v2534 = vpack.c.b16 %v2526, %v2525
        %2543 = vmatprep.subr.bf16.mxu0 0
        %2544 = vmatpush1.bf16.msra.mxu0 %v2527
        %2545 = vmatprep.subr.bf16.mxu0 0
        %2546 = vmatpush1.bf16.msra.mxu0 %v2528
        %2547 = vmatprep.subr.bf16.mxu0 0
        %2548 = vmatpush1.bf16.msra.mxu0 %v2529
        %2549 = vmatprep.subr.bf16.mxu0 0
        %2550 = vmatpush1.bf16.msra.mxu0 %v2530
        %2551 = vmatprep.subr.bf16.mxu0 0
        %2552 = vmatpush1.bf16.msra.mxu0 %v2531
        %2553 = vmatprep.subr.bf16.mxu0 0
        %2554 = vmatpush1.bf16.msra.mxu0 %v2532
        %2555 = vmatprep.subr.bf16.mxu0 0
        %2556 = vmatpush1.bf16.msra.mxu0 %v2533
        %2557 = vmatprep.subr.bf16.mxu0 0
        %2558 = vmatpush1.bf16.msra.mxu0 %v2534
        %2559 = vmatprep.subr.bf16.mxu0 0
        %2560 = vmatpush1.bf16.msra.mxu0 0
        %2561 = vmatprep.subr.bf16.mxu0 0
        %2562 = vmatpush1.bf16.msra.mxu0 0
        %2563 = vmatprep.subr.bf16.mxu0 0
        %2564 = vmatpush1.bf16.msra.mxu0 0
        %2565 = vmatprep.subr.bf16.mxu0 0
        %2566 = vmatpush1.bf16.msra.mxu0 0
        %2567 = vmatprep.subr.bf16.mxu0 0
        %2568 = vmatpush1.bf16.msra.mxu0 0
        %2569 = vmatprep.subr.bf16.mxu0 0
        %2570 = vmatpush1.bf16.msra.mxu0 0
        %2571 = vmatprep.subr.bf16.mxu0 0
        %2572 = vmatpush1.bf16.msra.mxu0 0
        %2573 = vmatprep.subr.bf16.mxu0 0
        %2574 = vmatpush1.bf16.msra.mxu0 0
        %2575 = vmatprep.mubr.bf16.mxu0 0
        %2576 = vmatmul.mubr.bf16.gmra.mrb[0].mxu0 %v2477
        %v2577 = vpop.f32.mrb[0].mxu0
        %v2578 = vadd.f32 %v2494, %v2577
        %v2579 = vpop.f32.mrb[0].mxu0
        %v2580 = vpop.f32.mrb[0].mxu0
        %v2581 = vpop.f32.mrb[0].mxu0
        %2582 = vdwg.mxu0
        %2583 = vst [vmem:[%s18] sm:$0x1] %v2578
      $region100: #{fully_connected_graph_forward.1} parent=91 // pred_fallthru
        _
      // Predicated region
      $region101: #{fully_connected_graph_forward.1} parent=91 // pred_check
        %p2584 = pneg %p435
      $region102: #{fully_connected_graph_forward.1} parent=91 // pred_check_branch
        %2586 = sbr.rel (%p2584) target = $region104
      $region103: #{fully_connected_graph_forward.1} parent=91 // pred_region
        _
      $region104: #{fully_connected_graph_forward.1} parent=91 // pred_fallthru
        _
      // Predicated region
      $region105: #{fully_connected_graph_forward.1} parent=91 // pred_check
        %p2587 = pneg %p435
      $region106: #{fully_connected_graph_forward.1} parent=91 // pred_check_branch
        %2589 = sbr.rel (%p2587) target = $region108
      $region107: #{fully_connected_graph_forward.1} parent=91 // pred_region
        _
      $region108: #{fully_connected_graph_forward.1} parent=91 // pred_fallthru
        _
    $region92: #{fully_connected_graph_forward.1} parent=5 // pred_fallthru
      _
    %p2590 = scmp.le.s32.totalorder 2, %s24
    // Predicated region
    $region109: #{fully_connected_graph_forward.1} parent=5 // pred_check
      %p2591 = pneg %p2590
    $region110: #{fully_connected_graph_forward.1} parent=5 // pred_check_branch
      %2593 = sbr.rel (%p2591) target = $region112
    $region111: #{fully_connected_graph_forward.1} parent=5 // pred_region
      %s2594 = ssub.s32 %s24, 2
    $region112: #{fully_connected_graph_forward.1} parent=5 // pred_fallthru
      _
  $region6: #{fully_connected_graph_forward.1} parent=0 // loop_footer
    %s28 = sadd.s32 1, %s24
  $region7: #{fully_connected_graph_forward.1} parent=0 // loop_footer_branch
    %23 = sbr.rel target = $region3
  $region8: #{fully_connected_graph_forward.1} parent=0 // loop_exit
    _

</llo_original>
